<compile_context>
chip_gen: v7x
topology: tpu7x:2x2x1
jax: 0.10.0
libtpu: 0.0.40
codegen_flags: <defaults>
</compile_context>

<pallas_src>
import functools

import jax
import jax.numpy as jnp
from jax import lax
from jax.experimental import pallas as pl
from jax.experimental.pallas import tpu as pltpu


def _attention_kernel(x_ref, wqkv_ref, wproj_ref, bproj_ref, mask_ref, o_ref,
                      *, num_heads: int, head_dim: int, dim: int):
    x = x_ref[0]                                       # (Np, C) bf16
    wqkv = wqkv_ref[...]                               # (C, 3C) bf16 (scale folded into Q cols)

    # Fused full-width QKV projection (f32 accumulation on the MXU).
    qkv = jnp.dot(x, wqkv, preferred_element_type=jnp.float32)       # (Np, 3C) f32

    mask = mask_ref[...]                               # (1, Np) additive key mask (0 / -1e30)

    heads_out = []
    for h in range(num_heads):                          # static, unrolled at trace time
        lo = h * head_dim
        hi = lo + head_dim
        q_h = qkv[:, lo:hi].astype(jnp.bfloat16)                       # (Np, Dh)
        k_h = qkv[:, dim + lo:dim + hi].astype(jnp.bfloat16)           # (Np, Dh)
        v_h = qkv[:, 2 * dim + lo:2 * dim + hi].astype(jnp.bfloat16)   # (Np, Dh)

        # scores = q_h @ k_h^T : contract the Dh dims directly (no explicit transpose).
        s = lax.dot_general(q_h, k_h, (((1,), (1,)), ((), ())),
                            preferred_element_type=jnp.float32)        # (Np, Np) f32
        s = s + mask                                    # kill padded key columns

        # Numerically-stable softmax in f32; approx reciprocal goes to the EUP slot.
        s = s - jnp.max(s, axis=-1, keepdims=True)
        p = jnp.exp(s)
        p = p * pl.reciprocal(jnp.sum(p, axis=-1, keepdims=True), approx=True)

        o_h = jnp.dot(p.astype(jnp.bfloat16), v_h,
                      preferred_element_type=jnp.float32)               # (Np, Dh)
        heads_out.append(o_h.astype(jnp.bfloat16))

    # Head concat + single full-width output projection.
    y = jnp.concatenate(heads_out, axis=-1)                             # (Np, C) bf16
    out = jnp.dot(y, wproj_ref[...], preferred_element_type=jnp.float32)  # (Np, C) f32
    o_ref[0] = (out + bproj_ref[...]).astype(o_ref.dtype)


def attention_pallas(x, w_qkv_t, w_proj_t, b_proj, *, num_heads: int):
    """x: (B, N, C); w_qkv_t: (C, 3C) [q|k|v] columns (head-major within each block);
    w_proj_t: (C, C); b_proj: (1, C)."""
    B, N, C = x.shape
    head_dim = C // num_heads
    scale = head_dim ** (-0.5)

    # ---- host-side prep (cheap, once per call / under jit) ----
    # Fold the softmax scale into the Q columns; run all matmul operands in bf16.
    w_qkv_f32 = w_qkv_t.astype(jnp.float32).at[:, :C].multiply(scale)
    wqkv_bf = w_qkv_f32.astype(jnp.bfloat16)                 # (C, 3C)
    wproj_bf = w_proj_t.astype(jnp.bfloat16)                 # (C, C)
    bproj_f32 = b_proj.astype(jnp.float32).reshape(1, C)     # (1, C)

    # Pad tokens to a lane-dense multiple of 128 (dense score tiles / unmasked vst).
    n_pad = ((N + 127) // 128) * 128
    x_in = jnp.pad(x, ((0, 0), (0, n_pad - N), (0, 0))) if n_pad != N else x
    x_bf = x_in.astype(jnp.bfloat16)

    # Additive key mask, built once and kept VMEM-resident (no per-step iota/where).
    col = jnp.arange(n_pad, dtype=jnp.int32)
    key_mask = jnp.where(col < N, 0.0, -1e30).astype(jnp.float32).reshape(1, n_pad)

    kernel = functools.partial(_attention_kernel, num_heads=num_heads,
                               head_dim=head_dim, dim=C)

    out = pl.pallas_call(
        kernel,
        out_shape=jax.ShapeDtypeStruct((B, n_pad, C), x.dtype),
        grid_spec=pltpu.PrefetchScalarGridSpec(
            num_scalar_prefetch=0,
            grid=(B,),
            in_specs=[
                pl.BlockSpec((1, n_pad, C), lambda b: (b, 0, 0)),   # x (per batch element)
                pl.BlockSpec((C, 3 * C), lambda b: (0, 0)),         # Wqkv (resident)
                pl.BlockSpec((C, C), lambda b: (0, 0)),             # Wproj (resident)
                pl.BlockSpec((1, C), lambda b: (0, 0)),             # proj bias (resident)
                pl.BlockSpec((1, n_pad), lambda b: (0, 0)),         # key mask (resident)
            ],
            out_specs=pl.BlockSpec((1, n_pad, C), lambda b: (b, 0, 0)),
        ),
        compiler_params=pltpu.CompilerParams(
            dimension_semantics=("parallel",)),
    )(x_bf, wqkv_bf, wproj_bf, bproj_f32, key_mask)

    return out[:, :N, :] if n_pad != N else out


def attention_reference(x, w_qkv_t, w_proj_t, b_proj, *, num_heads: int):
    """Plain-JAX (f32) mirror of the PyTorch forward for validation."""
    B, N, C = x.shape
    Dh = C // num_heads
    scale = Dh ** (-0.5)
    qkv = jnp.einsum('bnc,cd->bnd', x, w_qkv_t)                        # (B, N, 3C)
    qkv = qkv.reshape(B, N, 3, num_heads, Dh).transpose(2, 0, 3, 1, 4)
    q, k, v = qkv[0], qkv[1], qkv[2]                                   # (B, H, N, Dh)
    attn = jnp.einsum('bhnd,bhmd->bhnm', q, k) * scale
    attn = jax.nn.softmax(attn, axis=-1)
    y = jnp.einsum('bhnm,bhmd->bhnd', attn, v)                         # (B, H, N, Dh)
    y = y.transpose(0, 2, 1, 3).reshape(B, N, C)
    return jnp.einsum('bnc,cd->bnd', y, w_proj_t) + b_proj[0]


if __name__ == "__main__":
    # Small shapes consistent with the module: B=2 batches, N=8 tokens, C=32 dim.
    B, N, C = 2, 8, 32
    num_heads = 4

    key = jax.random.PRNGKey(0)
    kx, kqkv, kproj, kb = jax.random.split(key, 4)

    x = jax.random.normal(kx, (B, N, C), dtype=jnp.float32)
    # nn.Linear(dim, 3*dim, bias=False): weight (3C, C); we pass its transpose.
    w_qkv_t = (0.02 * jax.random.normal(kqkv, (C, 3 * C))).astype(jnp.float32)
    # nn.Linear(dim, dim): weight (C, C) + bias (C,); pass transpose + (1, C) bias.
    w_proj_t = (0.02 * jax.random.normal(kproj, (C, C))).astype(jnp.float32)
    b_proj = (0.01 * jax.random.normal(kb, (1, C))).astype(jnp.float32)

    out = jax.block_until_ready(
        attention_pallas(x, w_qkv_t, w_proj_t, b_proj, num_heads=num_heads))
    ref = attention_reference(x, w_qkv_t, w_proj_t, b_proj, num_heads=num_heads)
    assert out.shape == (B, N, C)
    err = float(jnp.max(jnp.abs(out - ref)))
    assert jnp.allclose(out, ref, atol=2e-3, rtol=2e-2), f"mismatch vs reference (max abs err {err})"

    # Also exercise the ragged-N path (key-column masking + padded query rows).
    N2 = 6
    x2 = jax.random.normal(kx, (1, N2, C), dtype=jnp.float32)
    out2 = jax.block_until_ready(
        attention_pallas(x2, w_qkv_t, w_proj_t, b_proj, num_heads=num_heads))
    ref2 = attention_reference(x2, w_qkv_t, w_proj_t, b_proj, num_heads=num_heads)
    assert out2.shape == (1, N2, C)
    err2 = float(jnp.max(jnp.abs(out2 - ref2)))
    assert jnp.allclose(out2, ref2, atol=2e-3, rtol=2e-2), f"mismatch vs reference, ragged N (max abs err {err2})"

    print("KERNEL_OK")
</pallas_src>

<mosaic_0001>
module attributes {stable_mosaic.version = 11 : i64} {
  func.func @_attention_kernel(%arg0: i32, %arg1: memref<1x128x32xbf16, #tpu.memory_space<vmem>>, %arg2: memref<32x96xbf16, #tpu.memory_space<vmem>>, %arg3: memref<32x32xbf16, #tpu.memory_space<vmem>>, %arg4: memref<1x32xf32, #tpu.memory_space<vmem>>, %arg5: memref<1x128xf32, #tpu.memory_space<vmem>>, %arg6: memref<1x128x32xf32, #tpu.memory_space<vmem>>) attributes {dimension_semantics = [#tpu.dimension_semantics<parallel>], iteration_bounds = array<i64: 2>, scalar_prefetch = 0 : i64, scratch_operands = 0 : i64, tpu.core_type = #tpu.core_type<tc>, window_params = [{transform_indices = @transform_0, window_bounds = array<i64: 1, 128, 32>}, {pipeline_mode = #tpu.pipeline_mode<synchronous>, transform_indices = @transform_1, window_bounds = array<i64: 32, 96>}, {pipeline_mode = #tpu.pipeline_mode<synchronous>, transform_indices = @transform_2, window_bounds = array<i64: 32, 32>}, {pipeline_mode = #tpu.pipeline_mode<synchronous>, transform_indices = @transform_3, window_bounds = array<i64: 1, 32>}, {pipeline_mode = #tpu.pipeline_mode<synchronous>, transform_indices = @transform_4, window_bounds = array<i64: 1, 128>}, {transform_indices = @transform_5, window_bounds = array<i64: 1, 128, 32>}]} {
    %c0 = arith.constant 0 : index
    %c0_0 = arith.constant 0 : index
    %c0_1 = arith.constant 0 : index
    %0 = vector.load %arg1[%c0, %c0_0, %c0_1] : memref<1x128x32xbf16, #tpu.memory_space<vmem>>, vector<1x128x32xbf16>
    %1 = vector.shape_cast %0 : vector<1x128x32xbf16> to vector<128x32xbf16>
    %c0_2 = arith.constant 0 : index
    %c0_3 = arith.constant 0 : index
    %2 = vector.load %arg2[%c0_2, %c0_3] : memref<32x96xbf16, #tpu.memory_space<vmem>>, vector<32x96xbf16>
    %cst = arith.constant dense<0.000000e+00> : vector<128x96xf32>
    %3 = tpu.matmul %1, %2, %cst {dimension_numbers = #tpu.dot_dimension_numbers<[1], [0], [0], [1], [0, 0, 1, 1], [], []>} : vector<128x32xbf16>, vector<32x96xbf16>, vector<128x96xf32> -> vector<128x96xf32>
    %c0_4 = arith.constant 0 : index
    %c0_5 = arith.constant 0 : index
    %4 = vector.load %arg5[%c0_4, %c0_5] : memref<1x128xf32, #tpu.memory_space<vmem>>, vector<1x128xf32>
    %5 = vector.extract_strided_slice %3 {offsets = [0, 0], sizes = [128, 8], strides = [1, 1]} : vector<128x96xf32> to vector<128x8xf32>
    %6 = arith.truncf %5 : vector<128x8xf32> to vector<128x8xbf16>
    %7 = vector.extract_strided_slice %3 {offsets = [0, 32], sizes = [128, 8], strides = [1, 1]} : vector<128x96xf32> to vector<128x8xf32>
    %8 = arith.truncf %7 : vector<128x8xf32> to vector<128x8xbf16>
    %9 = vector.extract_strided_slice %3 {offsets = [0, 64], sizes = [128, 8], strides = [1, 1]} : vector<128x96xf32> to vector<128x8xf32>
    %10 = arith.truncf %9 : vector<128x8xf32> to vector<128x8xbf16>
    %cst_6 = arith.constant dense<0.000000e+00> : vector<128x128xf32>
    %11 = tpu.matmul %6, %8, %cst_6 {dimension_numbers = #tpu.dot_dimension_numbers<[1], [1], [0], [0], [0, 0, 1, 0], [], []>} : vector<128x8xbf16>, vector<128x8xbf16>, vector<128x128xf32> -> vector<128x128xf32>
    %12 = vector.broadcast %4 : vector<1x128xf32> to vector<128x128xf32>
    %13 = arith.addf %11, %12 : vector<128x128xf32>
    %cst_7 = arith.constant dense<0xFF800000> : vector<128xf32>
    %14 = vector.multi_reduction <maximumf>, %13, %cst_7 [1] : vector<128x128xf32> to vector<128xf32>
    %15 = vector.shape_cast %14 : vector<128xf32> to vector<128x1xf32>
    %16 = vector.broadcast %15 : vector<128x1xf32> to vector<128x128xf32>
    %17 = arith.subf %13, %16 : vector<128x128xf32>
    %18 = math.exp %17 : vector<128x128xf32>
    %cst_8 = arith.constant dense<0.000000e+00> : vector<128xf32>
    %19 = vector.multi_reduction <add>, %18, %cst_8 [1] : vector<128x128xf32> to vector<128xf32>
    %20 = vector.shape_cast %19 : vector<128xf32> to vector<128x1xf32>
    %21 = tpu.reciprocal %20 {approx = true} : vector<128x1xf32> -> vector<128x1xf32>
    %22 = vector.broadcast %21 : vector<128x1xf32> to vector<128x128xf32>
    %23 = arith.mulf %18, %22 : vector<128x128xf32>
    %24 = arith.truncf %23 : vector<128x128xf32> to vector<128x128xbf16>
    %cst_9 = arith.constant dense<0.000000e+00> : vector<128x8xf32>
    %25 = tpu.matmul %24, %10, %cst_9 {dimension_numbers = #tpu.dot_dimension_numbers<[1], [0], [0], [1], [0, 0, 1, 1], [], []>} : vector<128x128xbf16>, vector<128x8xbf16>, vector<128x8xf32> -> vector<128x8xf32>
    %26 = arith.truncf %25 : vector<128x8xf32> to vector<128x8xbf16>
    %27 = vector.extract_strided_slice %3 {offsets = [0, 8], sizes = [128, 8], strides = [1, 1]} : vector<128x96xf32> to vector<128x8xf32>
    %28 = arith.truncf %27 : vector<128x8xf32> to vector<128x8xbf16>
    %29 = vector.extract_strided_slice %3 {offsets = [0, 40], sizes = [128, 8], strides = [1, 1]} : vector<128x96xf32> to vector<128x8xf32>
    %30 = arith.truncf %29 : vector<128x8xf32> to vector<128x8xbf16>
    %31 = vector.extract_strided_slice %3 {offsets = [0, 72], sizes = [128, 8], strides = [1, 1]} : vector<128x96xf32> to vector<128x8xf32>
    %32 = arith.truncf %31 : vector<128x8xf32> to vector<128x8xbf16>
    %cst_10 = arith.constant dense<0.000000e+00> : vector<128x128xf32>
    %33 = tpu.matmul %28, %30, %cst_10 {dimension_numbers = #tpu.dot_dimension_numbers<[1], [1], [0], [0], [0, 0, 1, 0], [], []>} : vector<128x8xbf16>, vector<128x8xbf16>, vector<128x128xf32> -> vector<128x128xf32>
    %34 = vector.broadcast %4 : vector<1x128xf32> to vector<128x128xf32>
    %35 = arith.addf %33, %34 : vector<128x128xf32>
    %cst_11 = arith.constant dense<0xFF800000> : vector<128xf32>
    %36 = vector.multi_reduction <maximumf>, %35, %cst_11 [1] : vector<128x128xf32> to vector<128xf32>
    %37 = vector.shape_cast %36 : vector<128xf32> to vector<128x1xf32>
    %38 = vector.broadcast %37 : vector<128x1xf32> to vector<128x128xf32>
    %39 = arith.subf %35, %38 : vector<128x128xf32>
    %40 = math.exp %39 : vector<128x128xf32>
    %cst_12 = arith.constant dense<0.000000e+00> : vector<128xf32>
    %41 = vector.multi_reduction <add>, %40, %cst_12 [1] : vector<128x128xf32> to vector<128xf32>
    %42 = vector.shape_cast %41 : vector<128xf32> to vector<128x1xf32>
    %43 = tpu.reciprocal %42 {approx = true} : vector<128x1xf32> -> vector<128x1xf32>
    %44 = vector.broadcast %43 : vector<128x1xf32> to vector<128x128xf32>
    %45 = arith.mulf %40, %44 : vector<128x128xf32>
    %46 = arith.truncf %45 : vector<128x128xf32> to vector<128x128xbf16>
    %cst_13 = arith.constant dense<0.000000e+00> : vector<128x8xf32>
    %47 = tpu.matmul %46, %32, %cst_13 {dimension_numbers = #tpu.dot_dimension_numbers<[1], [0], [0], [1], [0, 0, 1, 1], [], []>} : vector<128x128xbf16>, vector<128x8xbf16>, vector<128x8xf32> -> vector<128x8xf32>
    %48 = arith.truncf %47 : vector<128x8xf32> to vector<128x8xbf16>
    %49 = vector.extract_strided_slice %3 {offsets = [0, 16], sizes = [128, 8], strides = [1, 1]} : vector<128x96xf32> to vector<128x8xf32>
    %50 = arith.truncf %49 : vector<128x8xf32> to vector<128x8xbf16>
    %51 = vector.extract_strided_slice %3 {offsets = [0, 48], sizes = [128, 8], strides = [1, 1]} : vector<128x96xf32> to vector<128x8xf32>
    %52 = arith.truncf %51 : vector<128x8xf32> to vector<128x8xbf16>
    %53 = vector.extract_strided_slice %3 {offsets = [0, 80], sizes = [128, 8], strides = [1, 1]} : vector<128x96xf32> to vector<128x8xf32>
    %54 = arith.truncf %53 : vector<128x8xf32> to vector<128x8xbf16>
    %cst_14 = arith.constant dense<0.000000e+00> : vector<128x128xf32>
    %55 = tpu.matmul %50, %52, %cst_14 {dimension_numbers = #tpu.dot_dimension_numbers<[1], [1], [0], [0], [0, 0, 1, 0], [], []>} : vector<128x8xbf16>, vector<128x8xbf16>, vector<128x128xf32> -> vector<128x128xf32>
    %56 = vector.broadcast %4 : vector<1x128xf32> to vector<128x128xf32>
    %57 = arith.addf %55, %56 : vector<128x128xf32>
    %cst_15 = arith.constant dense<0xFF800000> : vector<128xf32>
    %58 = vector.multi_reduction <maximumf>, %57, %cst_15 [1] : vector<128x128xf32> to vector<128xf32>
    %59 = vector.shape_cast %58 : vector<128xf32> to vector<128x1xf32>
    %60 = vector.broadcast %59 : vector<128x1xf32> to vector<128x128xf32>
    %61 = arith.subf %57, %60 : vector<128x128xf32>
    %62 = math.exp %61 : vector<128x128xf32>
    %cst_16 = arith.constant dense<0.000000e+00> : vector<128xf32>
    %63 = vector.multi_reduction <add>, %62, %cst_16 [1] : vector<128x128xf32> to vector<128xf32>
    %64 = vector.shape_cast %63 : vector<128xf32> to vector<128x1xf32>
    %65 = tpu.reciprocal %64 {approx = true} : vector<128x1xf32> -> vector<128x1xf32>
    %66 = vector.broadcast %65 : vector<128x1xf32> to vector<128x128xf32>
    %67 = arith.mulf %62, %66 : vector<128x128xf32>
    %68 = arith.truncf %67 : vector<128x128xf32> to vector<128x128xbf16>
    %cst_17 = arith.constant dense<0.000000e+00> : vector<128x8xf32>
    %69 = tpu.matmul %68, %54, %cst_17 {dimension_numbers = #tpu.dot_dimension_numbers<[1], [0], [0], [1], [0, 0, 1, 1], [], []>} : vector<128x128xbf16>, vector<128x8xbf16>, vector<128x8xf32> -> vector<128x8xf32>
    %70 = arith.truncf %69 : vector<128x8xf32> to vector<128x8xbf16>
    %71 = vector.extract_strided_slice %3 {offsets = [0, 24], sizes = [128, 8], strides = [1, 1]} : vector<128x96xf32> to vector<128x8xf32>
    %72 = arith.truncf %71 : vector<128x8xf32> to vector<128x8xbf16>
    %73 = vector.extract_strided_slice %3 {offsets = [0, 56], sizes = [128, 8], strides = [1, 1]} : vector<128x96xf32> to vector<128x8xf32>
    %74 = arith.truncf %73 : vector<128x8xf32> to vector<128x8xbf16>
    %75 = vector.extract_strided_slice %3 {offsets = [0, 88], sizes = [128, 8], strides = [1, 1]} : vector<128x96xf32> to vector<128x8xf32>
    %76 = arith.truncf %75 : vector<128x8xf32> to vector<128x8xbf16>
    %cst_18 = arith.constant dense<0.000000e+00> : vector<128x128xf32>
    %77 = tpu.matmul %72, %74, %cst_18 {dimension_numbers = #tpu.dot_dimension_numbers<[1], [1], [0], [0], [0, 0, 1, 0], [], []>} : vector<128x8xbf16>, vector<128x8xbf16>, vector<128x128xf32> -> vector<128x128xf32>
    %78 = vector.broadcast %4 : vector<1x128xf32> to vector<128x128xf32>
    %79 = arith.addf %77, %78 : vector<128x128xf32>
    %cst_19 = arith.constant dense<0xFF800000> : vector<128xf32>
    %80 = vector.multi_reduction <maximumf>, %79, %cst_19 [1] : vector<128x128xf32> to vector<128xf32>
    %81 = vector.shape_cast %80 : vector<128xf32> to vector<128x1xf32>
    %82 = vector.broadcast %81 : vector<128x1xf32> to vector<128x128xf32>
    %83 = arith.subf %79, %82 : vector<128x128xf32>
    %84 = math.exp %83 : vector<128x128xf32>
    %cst_20 = arith.constant dense<0.000000e+00> : vector<128xf32>
    %85 = vector.multi_reduction <add>, %84, %cst_20 [1] : vector<128x128xf32> to vector<128xf32>
    %86 = vector.shape_cast %85 : vector<128xf32> to vector<128x1xf32>
    %87 = tpu.reciprocal %86 {approx = true} : vector<128x1xf32> -> vector<128x1xf32>
    %88 = vector.broadcast %87 : vector<128x1xf32> to vector<128x128xf32>
    %89 = arith.mulf %84, %88 : vector<128x128xf32>
    %90 = arith.truncf %89 : vector<128x128xf32> to vector<128x128xbf16>
    %cst_21 = arith.constant dense<0.000000e+00> : vector<128x8xf32>
    %91 = tpu.matmul %90, %76, %cst_21 {dimension_numbers = #tpu.dot_dimension_numbers<[1], [0], [0], [1], [0, 0, 1, 1], [], []>} : vector<128x128xbf16>, vector<128x8xbf16>, vector<128x8xf32> -> vector<128x8xf32>
    %92 = arith.truncf %91 : vector<128x8xf32> to vector<128x8xbf16>
    %93 = tpu.concatenate %26, %48, %70, %92 in 1 : vector<128x8xbf16>, vector<128x8xbf16>, vector<128x8xbf16>, vector<128x8xbf16> -> vector<128x32xbf16>
    %c0_22 = arith.constant 0 : index
    %c0_23 = arith.constant 0 : index
    %94 = vector.load %arg3[%c0_22, %c0_23] : memref<32x32xbf16, #tpu.memory_space<vmem>>, vector<32x32xbf16>
    %cst_24 = arith.constant dense<0.000000e+00> : vector<128x32xf32>
    %95 = tpu.matmul %93, %94, %cst_24 {dimension_numbers = #tpu.dot_dimension_numbers<[1], [0], [0], [1], [0, 0, 1, 1], [], []>} : vector<128x32xbf16>, vector<32x32xbf16>, vector<128x32xf32> -> vector<128x32xf32>
    %c0_25 = arith.constant 0 : index
    %c0_26 = arith.constant 0 : index
    %96 = vector.load %arg4[%c0_25, %c0_26] : memref<1x32xf32, #tpu.memory_space<vmem>>, vector<1x32xf32>
    %97 = vector.broadcast %96 : vector<1x32xf32> to vector<128x32xf32>
    %98 = arith.addf %95, %97 : vector<128x32xf32>
    %c0_27 = arith.constant 0 : index
    %c0_28 = arith.constant 0 : index
    %c0_29 = arith.constant 0 : index
    %99 = vector.load %arg6[%c0_27, %c0_28, %c0_29] : memref<1x128x32xf32, #tpu.memory_space<vmem>>, vector<1x128x32xf32>
    %100 = vector.shape_cast %99 : vector<1x128x32xf32> to vector<128x32xf32>
    %101 = vector.shape_cast %98 : vector<128x32xf32> to vector<1x128x32xf32>
    tpu.vector_store %arg6[%c0_27, %c0_28, %c0_29], %101 {strides = array<i32>} : memref<1x128x32xf32, #tpu.memory_space<vmem>>, vector<1x128x32xf32>,
    return
  }
  func.func @transform_0(%arg0: i32) -> (i32, i32, i32) {
    %c0_i32 = arith.constant 0 : i32
    %c0_i32_0 = arith.constant 0 : i32
    %c0_i32_1 = arith.constant 0 : i32
    return %arg0, %c0_i32, %c0_i32_0 : i32, i32, i32
  }
  func.func @transform_1(%arg0: i32) -> (i32, i32) {
    %c0_i32 = arith.constant 0 : i32
    %c0_i32_0 = arith.constant 0 : i32
    %c0_i32_1 = arith.constant 0 : i32
    return %c0_i32, %c0_i32_0 : i32, i32
  }
  func.func @transform_2(%arg0: i32) -> (i32, i32) {
    %c0_i32 = arith.constant 0 : i32
    %c0_i32_0 = arith.constant 0 : i32
    %c0_i32_1 = arith.constant 0 : i32
    return %c0_i32, %c0_i32_0 : i32, i32
  }
  func.func @transform_3(%arg0: i32) -> (i32, i32) {
    %c0_i32 = arith.constant 0 : i32
    %c0_i32_0 = arith.constant 0 : i32
    %c0_i32_1 = arith.constant 0 : i32
    return %c0_i32, %c0_i32_0 : i32, i32
  }
  func.func @transform_4(%arg0: i32) -> (i32, i32) {
    %c0_i32 = arith.constant 0 : i32
    %c0_i32_0 = arith.constant 0 : i32
    %c0_i32_1 = arith.constant 0 : i32
    return %c0_i32, %c0_i32_0 : i32, i32
  }
  func.func @transform_5(%arg0: i32) -> (i32, i32, i32) {
    %c0_i32 = arith.constant 0 : i32
    %c0_i32_0 = arith.constant 0 : i32
    %c0_i32_1 = arith.constant 0 : i32
    return %arg0, %c0_i32, %c0_i32_0 : i32, i32, i32
  }
}

</mosaic_0001>

<llo_original>
// kernel: tpu_custom_call.1
$region0: #{tpu_custom_call.1}
  #allocation0 [shape = 'u32[]', space=smem, size = 0x4, offset = 0x4, fixed_abs, tag = 'smem constant byte address 0x4 - core index']
  #allocation1 [shape = 'u32[144,128]{1,0:T(1,128)}', space=vmem, size = 0x12000, scoped, tag = 'internal scratch']
  %s0 = inlined_call_operand.vmem [shape: bf16[2,128,32], index: 0, kind: input, shape index: {}]
  %s1 = inlined_call_operand.vmem [shape: bf16[32,96], index: 1, kind: input, shape index: {}]
  %s2 = inlined_call_operand.vmem [shape: bf16[32,32], index: 2, kind: input, shape index: {}]
  %s3 = inlined_call_operand.vmem [shape: f32[1,32], index: 3, kind: input, shape index: {}]
  %s4 = inlined_call_operand.vmem [shape: f32[1,128], index: 4, kind: input, shape index: {}]
  %s5 = inlined_call_operand.vmem [shape: f32[2,128,32], index: 5, kind: output, shape index: {}]
  %s6 = sld [smem:[#allocation0]]
  $region53: #{tpu_custom_call.1} parent=0
    _
  %s8 = ssub.s32 1, %s6
  %s9 = scalar_select 0, %s8, %s6
  loop: start=0, step=1, limit=4
  $region2: #{tpu_custom_call.1} parent=0 // loop_pre_header
    _
  $region3: #{tpu_custom_call.1} parent=0 // loop_header
    %s11 = sphi 0, %s15
    %p12 = scmp.ge.s32.totalorder %s11, 4
    %s21 = sphi 0, %s23
    %s24 = sphi 0, %s21
    %s25 = sphi 0, %s24
    %s41 = sphi 0, %s25
    %s45 = sphi 0, %s45
    %s47 = sphi 0, %s45
    %s48 = sphi 0, %s47
    %s62 = sphi 0, %s48
    %s66 = sphi 0, %s66
    %s68 = sphi 0, %s66
    %s69 = sphi 0, %s68
    %s83 = sphi 0, %s69
    %s87 = sphi 0, %s87
    %s89 = sphi 0, %s87
    %s90 = sphi 0, %s89
    %s104 = sphi 0, %s90
    %s108 = sphi 0, %s108
    %s110 = sphi 0, %s108
    %s111 = sphi 0, %s110
    %s125 = sphi 0, %s111
    %s131 = sphi 0, %s133
    %s134 = sphi 0, %s131
    %s135 = sphi 0, %s134
    %s151 = sphi 0, %s135
  $region4: #{tpu_custom_call.1} parent=0 // loop_header_branch
    %14 = sbr.rel (%p12) target = $region8
  $region5: #{tpu_custom_call.1} parent=0 // loop_body
    %s16 = ssub.s32 %s11, 1
    %s17 = ssub.s32 %s11, 2
    %s18 = sadd.s32 %s11, 1
    %s19 = ssub.s32 %s11, %s18
    %p20 = scmp.eq.s32.totalorder %s19, 0
    %s22 = sadd.s32 %s21, 1
    %s23 = scalar_select %p20, %s21, %s22
    %p26 = pneg %p20
    %p27 = scmp.eq.s32.totalorder %s11, 1
    %p28 = por %p26, %p27
    %p29 = scmp.ne.s32.totalorder %s21, %s24
    %p30 = scmp.eq.s32.totalorder %s11, 0
    %p31 = por %p29, %p30
    %p32 = scmp.ne.s32.totalorder %s21, %s24
    %p33 = scmp.eq.s32.totalorder %s16, 1
    %p34 = por %p32, %p33
    %p35 = scmp.ne.s32.totalorder %s24, %s25
    %p36 = scmp.eq.s32.totalorder %s16, 0
    %p37 = por %p35, %p36
    %p38 = scmp.ne.s32.totalorder %s24, %s25
    %p39 = scmp.eq.s32.totalorder %s17, 1
    %p40 = por %p38, %p39
    %p42 = scmp.ne.s32.totalorder %s25, %s41
    %p43 = scmp.eq.s32.totalorder %s17, 0
    %p44 = por %p42, %p43
    %s46 = sadd.s32 %s45, 1
    %p49 = scmp.eq.s32.totalorder %s11, 1
    %p50 = scmp.ne.s32.totalorder %s45, %s47
    %p51 = scmp.eq.s32.totalorder %s11, 0
    %p52 = por %p50, %p51
    %p53 = scmp.ne.s32.totalorder %s45, %s47
    %p54 = scmp.eq.s32.totalorder %s16, 1
    %p55 = por %p53, %p54
    %p56 = scmp.ne.s32.totalorder %s47, %s48
    %p57 = scmp.eq.s32.totalorder %s16, 0
    %p58 = por %p56, %p57
    %p59 = scmp.ne.s32.totalorder %s47, %s48
    %p60 = scmp.eq.s32.totalorder %s17, 1
    %p61 = por %p59, %p60
    %p63 = scmp.ne.s32.totalorder %s48, %s62
    %p64 = scmp.eq.s32.totalorder %s17, 0
    %p65 = por %p63, %p64
    %s67 = sadd.s32 %s66, 1
    %p70 = scmp.eq.s32.totalorder %s11, 1
    %p71 = scmp.ne.s32.totalorder %s66, %s68
    %p72 = scmp.eq.s32.totalorder %s11, 0
    %p73 = por %p71, %p72
    %p74 = scmp.ne.s32.totalorder %s66, %s68
    %p75 = scmp.eq.s32.totalorder %s16, 1
    %p76 = por %p74, %p75
    %p77 = scmp.ne.s32.totalorder %s68, %s69
    %p78 = scmp.eq.s32.totalorder %s16, 0
    %p79 = por %p77, %p78
    %p80 = scmp.ne.s32.totalorder %s68, %s69
    %p81 = scmp.eq.s32.totalorder %s17, 1
    %p82 = por %p80, %p81
    %p84 = scmp.ne.s32.totalorder %s69, %s83
    %p85 = scmp.eq.s32.totalorder %s17, 0
    %p86 = por %p84, %p85
    %s88 = sadd.s32 %s87, 1
    %p91 = scmp.eq.s32.totalorder %s11, 1
    %p92 = scmp.ne.s32.totalorder %s87, %s89
    %p93 = scmp.eq.s32.totalorder %s11, 0
    %p94 = por %p92, %p93
    %p95 = scmp.ne.s32.totalorder %s87, %s89
    %p96 = scmp.eq.s32.totalorder %s16, 1
    %p97 = por %p95, %p96
    %p98 = scmp.ne.s32.totalorder %s89, %s90
    %p99 = scmp.eq.s32.totalorder %s16, 0
    %p100 = por %p98, %p99
    %p101 = scmp.ne.s32.totalorder %s89, %s90
    %p102 = scmp.eq.s32.totalorder %s17, 1
    %p103 = por %p101, %p102
    %p105 = scmp.ne.s32.totalorder %s90, %s104
    %p106 = scmp.eq.s32.totalorder %s17, 0
    %p107 = por %p105, %p106
    %s109 = sadd.s32 %s108, 1
    %p112 = scmp.eq.s32.totalorder %s11, 1
    %p113 = scmp.ne.s32.totalorder %s108, %s110
    %p114 = scmp.eq.s32.totalorder %s11, 0
    %p115 = por %p113, %p114
    %p116 = scmp.ne.s32.totalorder %s108, %s110
    %p117 = scmp.eq.s32.totalorder %s16, 1
    %p118 = por %p116, %p117
    %p119 = scmp.ne.s32.totalorder %s110, %s111
    %p120 = scmp.eq.s32.totalorder %s16, 0
    %p121 = por %p119, %p120
    %p122 = scmp.ne.s32.totalorder %s110, %s111
    %p123 = scmp.eq.s32.totalorder %s17, 1
    %p124 = por %p122, %p123
    %p126 = scmp.ne.s32.totalorder %s111, %s125
    %p127 = scmp.eq.s32.totalorder %s17, 0
    %p128 = por %p126, %p127
    %s129 = ssub.s32 %s11, %s18
    %p130 = scmp.eq.s32.totalorder %s129, 0
    %s132 = sadd.s32 %s131, 1
    %s133 = scalar_select %p130, %s131, %s132
    %p136 = pneg %p130
    %p137 = scmp.eq.s32.totalorder %s11, 1
    %p138 = por %p136, %p137
    %p139 = scmp.ne.s32.totalorder %s131, %s134
    %p140 = scmp.eq.s32.totalorder %s11, 0
    %p141 = por %p139, %p140
    %p142 = scmp.ne.s32.totalorder %s131, %s134
    %p143 = scmp.eq.s32.totalorder %s16, 1
    %p144 = por %p142, %p143
    %p145 = scmp.ne.s32.totalorder %s134, %s135
    %p146 = scmp.eq.s32.totalorder %s16, 0
    %p147 = por %p145, %p146
    %p148 = scmp.ne.s32.totalorder %s134, %s135
    %p149 = scmp.eq.s32.totalorder %s17, 1
    %p150 = por %p148, %p149
    %p152 = scmp.ne.s32.totalorder %s135, %s151
    %p153 = scmp.eq.s32.totalorder %s17, 0
    %p154 = por %p152, %p153
    %p155 = scmp.le.s32.totalorder 1, %s11
    %p156 = scmp.lt.s32.totalorder %s11, 3
    %p157 = pnand %p155, %p156
    %p158 = pneg %p157
    // Predicated region
    $region9: #{tpu_custom_call.1} parent=5 // pred_check
      _
    $region10: #{tpu_custom_call.1} parent=5 // pred_check_branch
      %160 = sbr.rel (%p157) target = $region12
    $region11: #{tpu_custom_call.1} parent=5 // pred_region
      %s161 = ssub.s32 %s11, 1
      // Predicated region
      $region13: #{tpu_custom_call.1} parent=11 // pred_check
        %p162 = pneg %p58
      $region14: #{tpu_custom_call.1} parent=11 // pred_check_branch
        %164 = sbr.rel (%p162) target = $region16
      $region15: #{tpu_custom_call.1} parent=11 // pred_region
        _
      $region16: #{tpu_custom_call.1} parent=11 // pred_fallthru
        _
      // Predicated region
      $region17: #{tpu_custom_call.1} parent=11 // pred_check
        %p165 = pneg %p79
      $region18: #{tpu_custom_call.1} parent=11 // pred_check_branch
        %167 = sbr.rel (%p165) target = $region20
      $region19: #{tpu_custom_call.1} parent=11 // pred_region
        _
      $region20: #{tpu_custom_call.1} parent=11 // pred_fallthru
        _
      // Predicated region
      $region21: #{tpu_custom_call.1} parent=11 // pred_check
        %p168 = pneg %p100
      $region22: #{tpu_custom_call.1} parent=11 // pred_check_branch
        %170 = sbr.rel (%p168) target = $region24
      $region23: #{tpu_custom_call.1} parent=11 // pred_region
        _
      $region24: #{tpu_custom_call.1} parent=11 // pred_fallthru
        _
      // Predicated region
      $region25: #{tpu_custom_call.1} parent=11 // pred_check
        %p171 = pneg %p121
      $region26: #{tpu_custom_call.1} parent=11 // pred_check_branch
        %173 = sbr.rel (%p171) target = $region28
      $region27: #{tpu_custom_call.1} parent=11 // pred_region
        _
      $region28: #{tpu_custom_call.1} parent=11 // pred_fallthru
        _
    $region12: #{tpu_custom_call.1} parent=5 // pred_fallthru
      _
    %p174 = scmp.lt.s32.totalorder %s11, 2
    // Predicated region
    $region29: #{tpu_custom_call.1} parent=5 // pred_check
      %p175 = pneg %p174
    $region30: #{tpu_custom_call.1} parent=5 // pred_check_branch
      %177 = sbr.rel (%p175) target = $region32
    $region31: #{tpu_custom_call.1} parent=5 // pred_region
      // Predicated region
      $region33: #{tpu_custom_call.1} parent=31 // pred_check
        %p178 = pneg %p31
      $region34: #{tpu_custom_call.1} parent=31 // pred_check_branch
        %180 = sbr.rel (%p178) target = $region36
      $region35: #{tpu_custom_call.1} parent=31 // pred_region
        %p181 = scmp.lt.s32.totalorder %s11, 1
        %s182 = scalar_select %p181, %s11, 1
        %s183 = smul.addr %s182, 16
        %s184 = smul.addr %s183, 4
        %s185 = scalar_lea.vmem %s0, %s184
      $region36: #{tpu_custom_call.1} parent=31 // pred_fallthru
        _
    $region32: #{tpu_custom_call.1} parent=5 // pred_fallthru
      _
    %p186 = scmp.le.s32.totalorder 1, %s11
    %p187 = scmp.lt.s32.totalorder %s11, 3
    %p188 = pnand %p186, %p187
    %p189 = pneg %p188
    // Predicated region
    $region37: #{tpu_custom_call.1} parent=5 // pred_check
      _
    $region38: #{tpu_custom_call.1} parent=5 // pred_check_branch
      %191 = sbr.rel (%p188) target = $region40
    $region39: #{tpu_custom_call.1} parent=5 // pred_region
      %s192 = ssub.s32 %s11, 1
      %p193 = scmp.lt.s32.totalorder %s16, 1
      %s194 = scalar_select %p193, %s16, 1
      %s195 = smul.addr %s194, 16
      %s196 = smul.addr %s195, 4
      %s197 = scalar_lea.vmem %s0, %s196
      %p198 = pneg %p37
      %p199 = pneg %p34
      %p200 = pneg %p58
      %p201 = pneg %p55
      %p202 = pneg %p79
      %p203 = pneg %p76
      %p204 = pneg %p100
      %p205 = pneg %p97
      %p206 = pneg %p121
      %p207 = pneg %p118
      %p208 = pneg %p147
      %p209 = pneg %p144
      %p210 = scmp.lt.s32.totalorder %s16, 1
      %s211 = scalar_select %p210, %s16, 1
      %s212 = smul.addr %s211, 16
      %s213 = smul.addr %s212, 8
      %s214 = scalar_lea.vmem %s5, %s213
      %p215 = scmp.lt.s32.totalorder %s16, 1
      %s216 = scalar_select %p215, %s16, 1
      %s217 = smul.addr %s216, 16
      %s218 = smul.addr %s217, 4
      %s219 = scalar_lea.vmem %s0, %s218
      %p220 = scmp.lt.s32.totalorder %s16, 1
      %s221 = scalar_select %p220, %s16, 1
      %s222 = smul.addr %s221, 16
      %s223 = smul.addr %s222, 8
      %s224 = scalar_lea.vmem %s5, %s223
      %v226 = vld [vmem:[%s219] sm:$0xf]
      %v227 = vld [vmem:[%s219 + $0x4] sm:$0xf]
      %v228 = vld [vmem:[%s219 + $0x8] sm:$0xf]
      %v229 = vld [vmem:[%s219 + $0xc] sm:$0xf]
      %v230 = vld [vmem:[%s219 + $0x10] sm:$0xf]
      %v231 = vld [vmem:[%s219 + $0x14] sm:$0xf]
      %v232 = vld [vmem:[%s219 + $0x18] sm:$0xf]
      %v233 = vld [vmem:[%s219 + $0x1c] sm:$0xf]
      %v234 = vld [vmem:[%s219 + $0x20] sm:$0xf]
      %v235 = vld [vmem:[%s219 + $0x24] sm:$0xf]
      %v236 = vld [vmem:[%s219 + $0x28] sm:$0xf]
      %v237 = vld [vmem:[%s219 + $0x2c] sm:$0xf]
      %v238 = vld [vmem:[%s219 + $0x30] sm:$0xf]
      %v239 = vld [vmem:[%s219 + $0x34] sm:$0xf]
      %v240 = vld [vmem:[%s219 + $0x38] sm:$0xf]
      %v241 = vld [vmem:[%s219 + $0x3c] sm:$0xf]
      %v242 = vld [vmem:[%s1] sm:$0xf]
      %v243 = vld [vmem:[%s1 + $0x4] sm:$0xf]
      %v244 = vld [vmem:[%s1 + $0x8] sm:$0xf]
      %v245 = vld [vmem:[%s1 + $0xc] sm:$0xf]
      %v262 = vunpack.c.l.b16 %v226
      %v263 = vunpack.c.l.b16 %v227
      %v264 = vunpack.c.l.b16 %v228
      %v265 = vunpack.c.l.b16 %v229
      %v266 = vunpack.c.l.b16 %v230
      %v267 = vunpack.c.l.b16 %v231
      %v268 = vunpack.c.l.b16 %v232
      %v269 = vunpack.c.l.b16 %v233
      %v270 = vunpack.c.l.b16 %v234
      %v271 = vunpack.c.l.b16 %v235
      %v272 = vunpack.c.l.b16 %v236
      %v273 = vunpack.c.l.b16 %v237
      %v274 = vunpack.c.l.b16 %v238
      %v275 = vunpack.c.l.b16 %v239
      %v276 = vunpack.c.l.b16 %v240
      %v277 = vunpack.c.l.b16 %v241
      %v278 = vpack.c.b16 %v263, %v262
      %v279 = vpack.c.b16 %v265, %v264
      %v280 = vpack.c.b16 %v267, %v266
      %v281 = vpack.c.b16 %v269, %v268
      %v282 = vpack.c.b16 %v271, %v270
      %v283 = vpack.c.b16 %v273, %v272
      %v284 = vpack.c.b16 %v275, %v274
      %v285 = vpack.c.b16 %v277, %v276
      %v290 = vunpack.c.l.b16 %v242
      %v291 = vunpack.c.l.b16 %v243
      %v292 = vunpack.c.l.b16 %v244
      %v293 = vunpack.c.l.b16 %v245
      %v294 = vpack.c.b16 %v291, %v290
      %v295 = vpack.c.b16 %v293, %v292
      %vm298 = vcmask 261120
      %v300 = vsel %vm298, %v278, 0
      %v303 = vsel %vm298, %v279, 0
      %v306 = vsel %vm298, %v280, 0
      %v309 = vsel %vm298, %v281, 0
      %v312 = vsel %vm298, %v282, 0
      %v315 = vsel %vm298, %v283, 0
      %v318 = vsel %vm298, %v284, 0
      %v321 = vsel %vm298, %v285, 0
      %323 = vmatprep.subr.bf16.mxu0 0
      %324 = vmatpush1.bf16.msra.mxu0 %v294
      %325 = vmatprep.subr.bf16.mxu0 0
      %326 = vmatpush1.bf16.msra.mxu0 %v295
      %327 = vmatprep.subr.bf16.mxu0 0
      %328 = vmatpush1.bf16.msra.mxu0 0
      %329 = vmatprep.subr.bf16.mxu0 0
      %330 = vmatpush1.bf16.msra.mxu0 0
      %331 = vmatprep.subr.bf16.mxu0 0
      %332 = vmatpush1.bf16.msra.mxu0 0
      %333 = vmatprep.subr.bf16.mxu0 0
      %334 = vmatpush1.bf16.msra.mxu0 0
      %335 = vmatprep.subr.bf16.mxu0 0
      %336 = vmatpush1.bf16.msra.mxu0 0
      %337 = vmatprep.subr.bf16.mxu0 0
      %338 = vmatpush1.bf16.msra.mxu0 0
      %339 = vmatprep.subr.bf16.mxu0 0
      %340 = vmatpush1.bf16.msra.mxu0 0
      %341 = vmatprep.subr.bf16.mxu0 0
      %342 = vmatpush1.bf16.msra.mxu0 0
      %343 = vmatprep.subr.bf16.mxu0 0
      %344 = vmatpush1.bf16.msra.mxu0 0
      %345 = vmatprep.subr.bf16.mxu0 0
      %346 = vmatpush1.bf16.msra.mxu0 0
      %347 = vmatprep.subr.bf16.mxu0 0
      %348 = vmatpush1.bf16.msra.mxu0 0
      %349 = vmatprep.subr.bf16.mxu0 0
      %350 = vmatpush1.bf16.msra.mxu0 0
      %351 = vmatprep.subr.bf16.mxu0 0
      %352 = vmatpush1.bf16.msra.mxu0 0
      %353 = vmatprep.subr.bf16.mxu0 0
      %354 = vmatpush1.bf16.msra.mxu0 0
      %355 = vmatprep.mubr.bf16.mxu0 0
      %356 = vmatmul.mubr.bf16.gmra.mrb[0].mxu0 %v300
      %v357 = vpop.f32.mrb[0].mxu0
      %v358 = vadd.f32 0.0, %v357
      %v359 = vpop.f32.mrb[0].mxu0
      %v360 = vpop.f32.mrb[0].mxu0
      %v361 = vadd.f32 0.0, %v360
      %v362 = vpop.f32.mrb[0].mxu0
      %363 = vmatprep.mubr.bf16.mxu0 0
      %364 = vmatmul.mubr.bf16.gmra.mrb[0].mxu0 %v303
      %v365 = vpop.f32.mrb[0].mxu0
      %v366 = vadd.f32 0.0, %v365
      %v367 = vpop.f32.mrb[0].mxu0
      %v368 = vpop.f32.mrb[0].mxu0
      %v369 = vadd.f32 0.0, %v368
      %v370 = vpop.f32.mrb[0].mxu0
      %371 = vmatprep.mubr.bf16.mxu0 0
      %372 = vmatmul.mubr.bf16.gmra.mrb[0].mxu0 %v306
      %v373 = vpop.f32.mrb[0].mxu0
      %v374 = vadd.f32 0.0, %v373
      %v375 = vpop.f32.mrb[0].mxu0
      %v376 = vpop.f32.mrb[0].mxu0
      %v377 = vadd.f32 0.0, %v376
      %v378 = vpop.f32.mrb[0].mxu0
      %379 = vmatprep.mubr.bf16.mxu0 0
      %380 = vmatmul.mubr.bf16.gmra.mrb[0].mxu0 %v309
      %v381 = vpop.f32.mrb[0].mxu0
      %v382 = vadd.f32 0.0, %v381
      %v383 = vpop.f32.mrb[0].mxu0
      %v384 = vpop.f32.mrb[0].mxu0
      %v385 = vadd.f32 0.0, %v384
      %v386 = vpop.f32.mrb[0].mxu0
      %387 = vmatprep.mubr.bf16.mxu0 0
      %388 = vmatmul.mubr.bf16.gmra.mrb[0].mxu0 %v312
      %v389 = vpop.f32.mrb[0].mxu0
      %v390 = vadd.f32 0.0, %v389
      %v391 = vpop.f32.mrb[0].mxu0
      %v392 = vpop.f32.mrb[0].mxu0
      %v393 = vadd.f32 0.0, %v392
      %v394 = vpop.f32.mrb[0].mxu0
      %395 = vmatprep.mubr.bf16.mxu0 0
      %396 = vmatmul.mubr.bf16.gmra.mrb[0].mxu0 %v315
      %v397 = vpop.f32.mrb[0].mxu0
      %v398 = vadd.f32 0.0, %v397
      %v399 = vpop.f32.mrb[0].mxu0
      %v400 = vpop.f32.mrb[0].mxu0
      %v401 = vadd.f32 0.0, %v400
      %v402 = vpop.f32.mrb[0].mxu0
      %403 = vmatprep.mubr.bf16.mxu0 0
      %404 = vmatmul.mubr.bf16.gmra.mrb[0].mxu0 %v318
      %v405 = vpop.f32.mrb[0].mxu0
      %v406 = vadd.f32 0.0, %v405
      %v407 = vpop.f32.mrb[0].mxu0
      %v408 = vpop.f32.mrb[0].mxu0
      %v409 = vadd.f32 0.0, %v408
      %v410 = vpop.f32.mrb[0].mxu0
      %411 = vmatprep.mubr.bf16.mxu0 0
      %412 = vmatmul.mubr.bf16.gmra.mrb[0].mxu0 %v321
      %v413 = vpop.f32.mrb[0].mxu0
      %v414 = vadd.f32 0.0, %v413
      %v415 = vpop.f32.mrb[0].mxu0
      %v416 = vpop.f32.mrb[0].mxu0
      %v417 = vadd.f32 0.0, %v416
      %v418 = vpop.f32.mrb[0].mxu0
      %419 = vdwg.mxu0
      %v420 = vld [vmem:[%s4] sm:$0x1]
      %v421 = vpack.c.bf16 %v361, %v358
      %v422 = vpack.c.bf16 %v369, %v366
      %v423 = vpack.c.bf16 %v377, %v374
      %v424 = vpack.c.bf16 %v385, %v382
      %v425 = vpack.c.bf16 %v393, %v390
      %v426 = vpack.c.bf16 %v401, %v398
      %v427 = vpack.c.bf16 %v409, %v406
      %v428 = vpack.c.bf16 %v417, %v414
      %v430 = vlaneseq
      %v431 = vshrl.u32 %v430, 7
      %v432 = vsub.s32 0, %v431
      %v433 = vrot.slane %v420, %v432
      %443 = vrot.lane.b32.xlu0 %v421, 96
      %v444 = vpop.permute.xlu0 %443
      %445 = vrot.lane.b32.xlu0 %v422, 96
      %v446 = vpop.permute.xlu0 %445
      %447 = vrot.lane.b32.xlu0 %v423, 96
      %v448 = vpop.permute.xlu0 %447
      %449 = vrot.lane.b32.xlu0 %v424, 96
      %v450 = vpop.permute.xlu0 %449
      %451 = vrot.lane.b32.xlu0 %v425, 96
      %v452 = vpop.permute.xlu0 %451
      %453 = vrot.lane.b32.xlu0 %v426, 96
      %v454 = vpop.permute.xlu0 %453
      %455 = vrot.lane.b32.xlu0 %v427, 96
      %v456 = vpop.permute.xlu0 %455
      %457 = vrot.lane.b32.xlu0 %v428, 96
      %v458 = vpop.permute.xlu0 %457
      %vm459 = vcmask 64512
      %v461 = vsel %vm459, %v421, 0
      %v464 = vsel %vm459, %v422, 0
      %v467 = vsel %vm459, %v423, 0
      %v470 = vsel %vm459, %v424, 0
      %v473 = vsel %vm459, %v425, 0
      %v476 = vsel %vm459, %v426, 0
      %v479 = vsel %vm459, %v427, 0
      %v482 = vsel %vm459, %v428, 0
      %v485 = vsel %vm459, %v444, 0
      %v488 = vsel %vm459, %v446, 0
      %v491 = vsel %vm459, %v448, 0
      %v494 = vsel %vm459, %v450, 0
      %v497 = vsel %vm459, %v452, 0
      %v500 = vsel %vm459, %v454, 0
      %v503 = vsel %vm459, %v456, 0
      %v506 = vsel %vm459, %v458, 0
      %508 = vmatprep.subr.bf16.mxu0 0
      %509 = vmatpush1.bf16.xpose.msra.mxu0 %v485
      %510 = vmatprep.subr.bf16.mxu0 0
      %511 = vmatpush1.bf16.xpose.msra.mxu0 %v488
      %512 = vmatprep.subr.bf16.mxu0 0
      %513 = vmatpush1.bf16.xpose.msra.mxu0 %v491
      %514 = vmatprep.subr.bf16.mxu0 0
      %515 = vmatpush1.bf16.xpose.msra.mxu0 %v494
      %516 = vmatprep.subr.bf16.mxu0 0
      %517 = vmatpush1.bf16.xpose.msra.mxu0 %v497
      %518 = vmatprep.subr.bf16.mxu0 0
      %519 = vmatpush1.bf16.xpose.msra.mxu0 %v500
      %520 = vmatprep.subr.bf16.mxu0 0
      %521 = vmatpush1.bf16.xpose.msra.mxu0 %v503
      %522 = vmatprep.subr.bf16.mxu0 0
      %523 = vmatpush1.bf16.xpose.msra.mxu0 %v506
      %524 = vmatprep.subr.bf16.mxu0 0
      %525 = vmatpush1.bf16.xpose.msra.mxu0 0
      %526 = vmatprep.subr.bf16.mxu0 0
      %527 = vmatpush1.bf16.xpose.msra.mxu0 0
      %528 = vmatprep.subr.bf16.mxu0 0
      %529 = vmatpush1.bf16.xpose.msra.mxu0 0
      %530 = vmatprep.subr.bf16.mxu0 0
      %531 = vmatpush1.bf16.xpose.msra.mxu0 0
      %532 = vmatprep.subr.bf16.mxu0 0
      %533 = vmatpush1.bf16.xpose.msra.mxu0 0
      %534 = vmatprep.subr.bf16.mxu0 0
      %535 = vmatpush1.bf16.xpose.msra.mxu0 0
      %536 = vmatprep.subr.bf16.mxu0 0
      %537 = vmatpush1.bf16.xpose.msra.mxu0 0
      %538 = vmatprep.subr.bf16.mxu0 0
      %539 = vmatpush1.bf16.xpose.msra.mxu0 0
      %540 = vmatprep.mubr.bf16.mxu0 0
      %541 = vmatmul.mubr.bf16.gmra.mrb[0].mxu0 %v461
      %v542 = vpop.f32.mrb[0].mxu0
      %v543 = vadd.f32 %v433, %v542
      %v544 = vpop.f32.mrb[0].mxu0
      %v545 = vpop.f32.mrb[0].mxu0
      %v546 = vadd.f32 %v433, %v545
      %v547 = vpop.f32.mrb[0].mxu0
      %548 = vmatprep.mubr.bf16.mxu0 0
      %549 = vmatmul.mubr.bf16.gmra.mrb[0].mxu0 %v464
      %v550 = vpop.f32.mrb[0].mxu0
      %v551 = vadd.f32 %v433, %v550
      %v552 = vpop.f32.mrb[0].mxu0
      %v553 = vpop.f32.mrb[0].mxu0
      %v554 = vadd.f32 %v433, %v553
      %v555 = vpop.f32.mrb[0].mxu0
      %556 = vmatprep.mubr.bf16.mxu0 0
      %557 = vmatmul.mubr.bf16.gmra.mrb[0].mxu0 %v467
      %v558 = vpop.f32.mrb[0].mxu0
      %v559 = vadd.f32 %v433, %v558
      %v560 = vpop.f32.mrb[0].mxu0
      %v561 = vpop.f32.mrb[0].mxu0
      %v562 = vadd.f32 %v433, %v561
      %v563 = vpop.f32.mrb[0].mxu0
      %564 = vmatprep.mubr.bf16.mxu0 0
      %565 = vmatmul.mubr.bf16.gmra.mrb[0].mxu0 %v470
      %v566 = vpop.f32.mrb[0].mxu0
      %v567 = vadd.f32 %v433, %v566
      %v568 = vpop.f32.mrb[0].mxu0
      %v569 = vpop.f32.mrb[0].mxu0
      %v570 = vadd.f32 %v433, %v569
      %v571 = vpop.f32.mrb[0].mxu0
      %572 = vmatprep.mubr.bf16.mxu0 0
      %573 = vmatmul.mubr.bf16.gmra.mrb[0].mxu0 %v473
      %v574 = vpop.f32.mrb[0].mxu0
      %v575 = vadd.f32 %v433, %v574
      %v576 = vpop.f32.mrb[0].mxu0
      %v577 = vpop.f32.mrb[0].mxu0
      %v578 = vadd.f32 %v433, %v577
      %v579 = vpop.f32.mrb[0].mxu0
      %580 = vmatprep.mubr.bf16.mxu0 0
      %581 = vmatmul.mubr.bf16.gmra.mrb[0].mxu0 %v476
      %v582 = vpop.f32.mrb[0].mxu0
      %v583 = vadd.f32 %v433, %v582
      %v584 = vpop.f32.mrb[0].mxu0
      %v585 = vpop.f32.mrb[0].mxu0
      %v586 = vadd.f32 %v433, %v585
      %v587 = vpop.f32.mrb[0].mxu0
      %588 = vmatprep.mubr.bf16.mxu0 0
      %589 = vmatmul.mubr.bf16.gmra.mrb[0].mxu0 %v479
      %v590 = vpop.f32.mrb[0].mxu0
      %v591 = vadd.f32 %v433, %v590
      %v592 = vpop.f32.mrb[0].mxu0
      %v593 = vpop.f32.mrb[0].mxu0
      %v594 = vadd.f32 %v433, %v593
      %v595 = vpop.f32.mrb[0].mxu0
      %596 = vmatprep.mubr.bf16.mxu0 0
      %597 = vmatmul.mubr.bf16.gmra.mrb[0].mxu0 %v482
      %v598 = vpop.f32.mrb[0].mxu0
      %v599 = vadd.f32 %v433, %v598
      %v600 = vpop.f32.mrb[0].mxu0
      %v601 = vpop.f32.mrb[0].mxu0
      %v602 = vadd.f32 %v433, %v601
      %v603 = vpop.f32.mrb[0].mxu0
      %604 = vdwg.mxu0
      %605 = vmax.xlane.f32.xlu0 %v543
      %v606 = vpop.xlane.xlu0 %605
      %607 = vmax.xlane.f32.xlu0 %v546
      %v608 = vpop.xlane.xlu0 %607
      %609 = vmax.xlane.f32.xlu0 %v551
      %v610 = vpop.xlane.xlu0 %609
      %611 = vmax.xlane.f32.xlu0 %v554
      %v612 = vpop.xlane.xlu0 %611
      %613 = vmax.xlane.f32.xlu0 %v559
      %v614 = vpop.xlane.xlu0 %613
      %615 = vmax.xlane.f32.xlu0 %v562
      %v616 = vpop.xlane.xlu0 %615
      %617 = vmax.xlane.f32.xlu0 %v567
      %v618 = vpop.xlane.xlu0 %617
      %619 = vmax.xlane.f32.xlu0 %v570
      %v620 = vpop.xlane.xlu0 %619
      %621 = vmax.xlane.f32.xlu0 %v575
      %v622 = vpop.xlane.xlu0 %621
      %623 = vmax.xlane.f32.xlu0 %v578
      %v624 = vpop.xlane.xlu0 %623
      %625 = vmax.xlane.f32.xlu0 %v583
      %v626 = vpop.xlane.xlu0 %625
      %627 = vmax.xlane.f32.xlu0 %v586
      %v628 = vpop.xlane.xlu0 %627
      %629 = vmax.xlane.f32.xlu0 %v591
      %v630 = vpop.xlane.xlu0 %629
      %631 = vmax.xlane.f32.xlu0 %v594
      %v632 = vpop.xlane.xlu0 %631
      %633 = vmax.xlane.f32.xlu0 %v599
      %v634 = vpop.xlane.xlu0 %633
      %635 = vmax.xlane.f32.xlu0 %v602
      %v636 = vpop.xlane.xlu0 %635
      %v637 = vsub.f32 %v543, %v606
      %v638 = vsub.f32 %v546, %v608
      %v639 = vsub.f32 %v551, %v610
      %v640 = vsub.f32 %v554, %v612
      %v641 = vsub.f32 %v559, %v614
      %v642 = vsub.f32 %v562, %v616
      %v643 = vsub.f32 %v567, %v618
      %v644 = vsub.f32 %v570, %v620
      %v645 = vsub.f32 %v575, %v622
      %v646 = vsub.f32 %v578, %v624
      %v647 = vsub.f32 %v583, %v626
      %v648 = vsub.f32 %v586, %v628
      %v649 = vsub.f32 %v591, %v630
      %v650 = vsub.f32 %v594, %v632
      %v651 = vsub.f32 %v599, %v634
      %v652 = vsub.f32 %v602, %v636
      %v653 = vmul.f32 %v637, 1.442695
      %v654 = vpow.pop %v653
      %v655 = vmul.f32 %v638, 1.442695
      %v656 = vpow.pop %v655
      %v657 = vmul.f32 %v639, 1.442695
      %v658 = vpow.pop %v657
      %v659 = vmul.f32 %v640, 1.442695
      %v660 = vpow.pop %v659
      %v661 = vmul.f32 %v641, 1.442695
      %v662 = vpow.pop %v661
      %v663 = vmul.f32 %v642, 1.442695
      %v664 = vpow.pop %v663
      %v665 = vmul.f32 %v643, 1.442695
      %v666 = vpow.pop %v665
      %v667 = vmul.f32 %v644, 1.442695
      %v668 = vpow.pop %v667
      %v669 = vmul.f32 %v645, 1.442695
      %v670 = vpow.pop %v669
      %v671 = vmul.f32 %v646, 1.442695
      %v672 = vpow.pop %v671
      %v673 = vmul.f32 %v647, 1.442695
      %v674 = vpow.pop %v673
      %v675 = vmul.f32 %v648, 1.442695
      %v676 = vpow.pop %v675
      %v677 = vmul.f32 %v649, 1.442695
      %v678 = vpow.pop %v677
      %v679 = vmul.f32 %v650, 1.442695
      %v680 = vpow.pop %v679
      %v681 = vmul.f32 %v651, 1.442695
      %v682 = vpow.pop %v681
      %v683 = vmul.f32 %v652, 1.442695
      %v684 = vpow.pop %v683
      %685 = vadd.xlane.f32.xlu0 %v654
      %v686 = vpop.xlane.xlu0 %685
      %687 = vadd.xlane.f32.xlu0 %v656
      %v688 = vpop.xlane.xlu0 %687
      %689 = vadd.xlane.f32.xlu0 %v658
      %v690 = vpop.xlane.xlu0 %689
      %691 = vadd.xlane.f32.xlu0 %v660
      %v692 = vpop.xlane.xlu0 %691
      %693 = vadd.xlane.f32.xlu0 %v662
      %v694 = vpop.xlane.xlu0 %693
      %695 = vadd.xlane.f32.xlu0 %v664
      %v696 = vpop.xlane.xlu0 %695
      %697 = vadd.xlane.f32.xlu0 %v666
      %v698 = vpop.xlane.xlu0 %697
      %699 = vadd.xlane.f32.xlu0 %v668
      %v700 = vpop.xlane.xlu0 %699
      %701 = vadd.xlane.f32.xlu0 %v670
      %v702 = vpop.xlane.xlu0 %701
      %703 = vadd.xlane.f32.xlu0 %v672
      %v704 = vpop.xlane.xlu0 %703
      %705 = vadd.xlane.f32.xlu0 %v674
      %v706 = vpop.xlane.xlu0 %705
      %707 = vadd.xlane.f32.xlu0 %v676
      %v708 = vpop.xlane.xlu0 %707
      %709 = vadd.xlane.f32.xlu0 %v678
      %v710 = vpop.xlane.xlu0 %709
      %711 = vadd.xlane.f32.xlu0 %v680
      %v712 = vpop.xlane.xlu0 %711
      %713 = vadd.xlane.f32.xlu0 %v682
      %v714 = vpop.xlane.xlu0 %713
      %715 = vadd.xlane.f32.xlu0 %v684
      %v716 = vpop.xlane.xlu0 %715
      %v717 = vrcp.pop %v686
      %v718 = vrcp.pop %v688
      %v719 = vrcp.pop %v690
      %v720 = vrcp.pop %v692
      %v721 = vrcp.pop %v694
      %v722 = vrcp.pop %v696
      %v723 = vrcp.pop %v698
      %v724 = vrcp.pop %v700
      %v725 = vrcp.pop %v702
      %v726 = vrcp.pop %v704
      %v727 = vrcp.pop %v706
      %v728 = vrcp.pop %v708
      %v729 = vrcp.pop %v710
      %v730 = vrcp.pop %v712
      %v731 = vrcp.pop %v714
      %v732 = vrcp.pop %v716
      %v733 = vmul.f32 %v654, %v717
      %v734 = vmul.f32 %v656, %v718
      %v735 = vmul.f32 %v658, %v719
      %v736 = vmul.f32 %v660, %v720
      %v737 = vmul.f32 %v662, %v721
      %v738 = vmul.f32 %v664, %v722
      %v739 = vmul.f32 %v666, %v723
      %v740 = vmul.f32 %v668, %v724
      %v741 = vmul.f32 %v670, %v725
      %v742 = vmul.f32 %v672, %v726
      %v743 = vmul.f32 %v674, %v727
      %v744 = vmul.f32 %v676, %v728
      %v745 = vmul.f32 %v678, %v729
      %v746 = vmul.f32 %v680, %v730
      %v747 = vmul.f32 %v682, %v731
      %v748 = vmul.f32 %v684, %v732
      %v749 = vpack.c.bf16 %v734, %v733
      %v750 = vpack.c.bf16 %v736, %v735
      %v751 = vpack.c.bf16 %v738, %v737
      %v752 = vpack.c.bf16 %v740, %v739
      %v753 = vpack.c.bf16 %v742, %v741
      %v754 = vpack.c.bf16 %v744, %v743
      %v755 = vpack.c.bf16 %v746, %v745
      %v756 = vpack.c.bf16 %v748, %v747
      %757 = vrot.lane.b32.xlu0 %v421, 64
      %v758 = vpop.permute.xlu0 %757
      %759 = vrot.lane.b32.xlu0 %v422, 64
      %v760 = vpop.permute.xlu0 %759
      %761 = vrot.lane.b32.xlu0 %v423, 64
      %v762 = vpop.permute.xlu0 %761
      %763 = vrot.lane.b32.xlu0 %v424, 64
      %v764 = vpop.permute.xlu0 %763
      %765 = vrot.lane.b32.xlu0 %v425, 64
      %v766 = vpop.permute.xlu0 %765
      %767 = vrot.lane.b32.xlu0 %v426, 64
      %v768 = vpop.permute.xlu0 %767
      %769 = vrot.lane.b32.xlu0 %v427, 64
      %v770 = vpop.permute.xlu0 %769
      %771 = vrot.lane.b32.xlu0 %v428, 64
      %v772 = vpop.permute.xlu0 %771
      %781 = vmatprep.subr.bf16.mxu0 0
      %782 = vmatpush1.bf16.msra.mxu0 %v758
      %783 = vmatprep.subr.bf16.mxu0 0
      %784 = vmatpush1.bf16.msra.mxu0 %v760
      %785 = vmatprep.subr.bf16.mxu0 0
      %786 = vmatpush1.bf16.msra.mxu0 %v762
      %787 = vmatprep.subr.bf16.mxu0 0
      %788 = vmatpush1.bf16.msra.mxu0 %v764
      %789 = vmatprep.subr.bf16.mxu0 0
      %790 = vmatpush1.bf16.msra.mxu0 %v766
      %791 = vmatprep.subr.bf16.mxu0 0
      %792 = vmatpush1.bf16.msra.mxu0 %v768
      %793 = vmatprep.subr.bf16.mxu0 0
      %794 = vmatpush1.bf16.msra.mxu0 %v770
      %795 = vmatprep.subr.bf16.mxu0 0
      %796 = vmatpush1.bf16.msra.mxu0 %v772
      %797 = vmatprep.subr.bf16.mxu0 0
      %798 = vmatpush1.bf16.msra.mxu0 0
      %799 = vmatprep.subr.bf16.mxu0 0
      %800 = vmatpush1.bf16.msra.mxu0 0
      %801 = vmatprep.subr.bf16.mxu0 0
      %802 = vmatpush1.bf16.msra.mxu0 0
      %803 = vmatprep.subr.bf16.mxu0 0
      %804 = vmatpush1.bf16.msra.mxu0 0
      %805 = vmatprep.subr.bf16.mxu0 0
      %806 = vmatpush1.bf16.msra.mxu0 0
      %807 = vmatprep.subr.bf16.mxu0 0
      %808 = vmatpush1.bf16.msra.mxu0 0
      %809 = vmatprep.subr.bf16.mxu0 0
      %810 = vmatpush1.bf16.msra.mxu0 0
      %811 = vmatprep.subr.bf16.mxu0 0
      %812 = vmatpush1.bf16.msra.mxu0 0
      %813 = vmatprep.mubr.bf16.mxu0 0
      %814 = vmatmul.mubr.bf16.gmra.mrb[0].mxu0 %v749
      %v815 = vpop.f32.mrb[0].mxu0
      %v816 = vadd.f32 0.0, %v815
      %v817 = vpop.f32.mrb[0].mxu0
      %v818 = vpop.f32.mrb[0].mxu0
      %v819 = vadd.f32 0.0, %v818
      %v820 = vpop.f32.mrb[0].mxu0
      %821 = vmatprep.mubr.bf16.mxu0 0
      %822 = vmatmul.mubr.bf16.gmra.mrb[0].mxu0 %v750
      %v823 = vpop.f32.mrb[0].mxu0
      %v824 = vadd.f32 0.0, %v823
      %v825 = vpop.f32.mrb[0].mxu0
      %v826 = vpop.f32.mrb[0].mxu0
      %v827 = vadd.f32 0.0, %v826
      %v828 = vpop.f32.mrb[0].mxu0
      %829 = vmatprep.mubr.bf16.mxu0 0
      %830 = vmatmul.mubr.bf16.gmra.mrb[0].mxu0 %v751
      %v831 = vpop.f32.mrb[0].mxu0
      %v832 = vadd.f32 0.0, %v831
      %v833 = vpop.f32.mrb[0].mxu0
      %v834 = vpop.f32.mrb[0].mxu0
      %v835 = vadd.f32 0.0, %v834
      %v836 = vpop.f32.mrb[0].mxu0
      %837 = vmatprep.mubr.bf16.mxu0 0
      %838 = vmatmul.mubr.bf16.gmra.mrb[0].mxu0 %v752
      %v839 = vpop.f32.mrb[0].mxu0
      %v840 = vadd.f32 0.0, %v839
      %v841 = vpop.f32.mrb[0].mxu0
      %v842 = vpop.f32.mrb[0].mxu0
      %v843 = vadd.f32 0.0, %v842
      %v844 = vpop.f32.mrb[0].mxu0
      %845 = vmatprep.mubr.bf16.mxu0 0
      %846 = vmatmul.mubr.bf16.gmra.mrb[0].mxu0 %v753
      %v847 = vpop.f32.mrb[0].mxu0
      %v848 = vadd.f32 0.0, %v847
      %v849 = vpop.f32.mrb[0].mxu0
      %v850 = vpop.f32.mrb[0].mxu0
      %v851 = vadd.f32 0.0, %v850
      %v852 = vpop.f32.mrb[0].mxu0
      %853 = vmatprep.mubr.bf16.mxu0 0
      %854 = vmatmul.mubr.bf16.gmra.mrb[0].mxu0 %v754
      %v855 = vpop.f32.mrb[0].mxu0
      %v856 = vadd.f32 0.0, %v855
      %v857 = vpop.f32.mrb[0].mxu0
      %v858 = vpop.f32.mrb[0].mxu0
      %v859 = vadd.f32 0.0, %v858
      %v860 = vpop.f32.mrb[0].mxu0
      %861 = vmatprep.mubr.bf16.mxu0 0
      %862 = vmatmul.mubr.bf16.gmra.mrb[0].mxu0 %v755
      %v863 = vpop.f32.mrb[0].mxu0
      %v864 = vadd.f32 0.0, %v863
      %v865 = vpop.f32.mrb[0].mxu0
      %v866 = vpop.f32.mrb[0].mxu0
      %v867 = vadd.f32 0.0, %v866
      %v868 = vpop.f32.mrb[0].mxu0
      %869 = vmatprep.mubr.bf16.mxu0 0
      %870 = vmatmul.mubr.bf16.gmra.mrb[0].mxu0 %v756
      %v871 = vpop.f32.mrb[0].mxu0
      %v872 = vadd.f32 0.0, %v871
      %v873 = vpop.f32.mrb[0].mxu0
      %v874 = vpop.f32.mrb[0].mxu0
      %v875 = vadd.f32 0.0, %v874
      %v876 = vpop.f32.mrb[0].mxu0
      %877 = vdwg.mxu0
      %v878 = vpack.c.bf16 %v819, %v816
      %v879 = vpack.c.bf16 %v827, %v824
      %v880 = vpack.c.bf16 %v835, %v832
      %v881 = vpack.c.bf16 %v843, %v840
      %v882 = vpack.c.bf16 %v851, %v848
      %v883 = vpack.c.bf16 %v859, %v856
      %v884 = vpack.c.bf16 %v867, %v864
      %v885 = vpack.c.bf16 %v875, %v872
      %886 = vrot.lane.b32.xlu0 %v421, 120
      %v887 = vpop.permute.xlu0 %886
      %888 = vrot.lane.b32.xlu0 %v422, 120
      %v889 = vpop.permute.xlu0 %888
      %890 = vrot.lane.b32.xlu0 %v423, 120
      %v891 = vpop.permute.xlu0 %890
      %892 = vrot.lane.b32.xlu0 %v424, 120
      %v893 = vpop.permute.xlu0 %892
      %894 = vrot.lane.b32.xlu0 %v425, 120
      %v895 = vpop.permute.xlu0 %894
      %896 = vrot.lane.b32.xlu0 %v426, 120
      %v897 = vpop.permute.xlu0 %896
      %898 = vrot.lane.b32.xlu0 %v427, 120
      %v899 = vpop.permute.xlu0 %898
      %900 = vrot.lane.b32.xlu0 %v428, 120
      %v901 = vpop.permute.xlu0 %900
      %902 = vrot.lane.b32.xlu0 %v421, 88
      %v903 = vpop.permute.xlu0 %902
      %904 = vrot.lane.b32.xlu0 %v422, 88
      %v905 = vpop.permute.xlu0 %904
      %906 = vrot.lane.b32.xlu0 %v423, 88
      %v907 = vpop.permute.xlu0 %906
      %908 = vrot.lane.b32.xlu0 %v424, 88
      %v909 = vpop.permute.xlu0 %908
      %910 = vrot.lane.b32.xlu0 %v425, 88
      %v911 = vpop.permute.xlu0 %910
      %912 = vrot.lane.b32.xlu0 %v426, 88
      %v913 = vpop.permute.xlu0 %912
      %914 = vrot.lane.b32.xlu0 %v427, 88
      %v915 = vpop.permute.xlu0 %914
      %916 = vrot.lane.b32.xlu0 %v428, 88
      %v917 = vpop.permute.xlu0 %916
      %v919 = vsel %vm459, %v887, 0
      %v922 = vsel %vm459, %v889, 0
      %v925 = vsel %vm459, %v891, 0
      %v928 = vsel %vm459, %v893, 0
      %v931 = vsel %vm459, %v895, 0
      %v934 = vsel %vm459, %v897, 0
      %v937 = vsel %vm459, %v899, 0
      %v940 = vsel %vm459, %v901, 0
      %v943 = vsel %vm459, %v903, 0
      %v946 = vsel %vm459, %v905, 0
      %v949 = vsel %vm459, %v907, 0
      %v952 = vsel %vm459, %v909, 0
      %v955 = vsel %vm459, %v911, 0
      %v958 = vsel %vm459, %v913, 0
      %v961 = vsel %vm459, %v915, 0
      %v964 = vsel %vm459, %v917, 0
      %966 = vmatprep.subr.bf16.mxu0 0
      %967 = vmatpush1.bf16.xpose.msra.mxu0 %v943
      %968 = vmatprep.subr.bf16.mxu0 0
      %969 = vmatpush1.bf16.xpose.msra.mxu0 %v946
      %970 = vmatprep.subr.bf16.mxu0 0
      %971 = vmatpush1.bf16.xpose.msra.mxu0 %v949
      %972 = vmatprep.subr.bf16.mxu0 0
      %973 = vmatpush1.bf16.xpose.msra.mxu0 %v952
      %974 = vmatprep.subr.bf16.mxu0 0
      %975 = vmatpush1.bf16.xpose.msra.mxu0 %v955
      %976 = vmatprep.subr.bf16.mxu0 0
      %977 = vmatpush1.bf16.xpose.msra.mxu0 %v958
      %978 = vmatprep.subr.bf16.mxu0 0
      %979 = vmatpush1.bf16.xpose.msra.mxu0 %v961
      %980 = vmatprep.subr.bf16.mxu0 0
      %981 = vmatpush1.bf16.xpose.msra.mxu0 %v964
      %982 = vmatprep.subr.bf16.mxu0 0
      %983 = vmatpush1.bf16.xpose.msra.mxu0 0
      %984 = vmatprep.subr.bf16.mxu0 0
      %985 = vmatpush1.bf16.xpose.msra.mxu0 0
      %986 = vmatprep.subr.bf16.mxu0 0
      %987 = vmatpush1.bf16.xpose.msra.mxu0 0
      %988 = vmatprep.subr.bf16.mxu0 0
      %989 = vmatpush1.bf16.xpose.msra.mxu0 0
      %990 = vmatprep.subr.bf16.mxu0 0
      %991 = vmatpush1.bf16.xpose.msra.mxu0 0
      %992 = vmatprep.subr.bf16.mxu0 0
      %993 = vmatpush1.bf16.xpose.msra.mxu0 0
      %994 = vmatprep.subr.bf16.mxu0 0
      %995 = vmatpush1.bf16.xpose.msra.mxu0 0
      %996 = vmatprep.subr.bf16.mxu0 0
      %997 = vmatpush1.bf16.xpose.msra.mxu0 0
      %998 = vmatprep.mubr.bf16.mxu0 0
      %999 = vmatmul.mubr.bf16.gmra.mrb[0].mxu0 %v919
      %v1000 = vpop.f32.mrb[0].mxu0
      %v1001 = vadd.f32 %v433, %v1000
      %v1002 = vpop.f32.mrb[0].mxu0
      %v1003 = vpop.f32.mrb[0].mxu0
      %v1004 = vadd.f32 %v433, %v1003
      %v1005 = vpop.f32.mrb[0].mxu0
      %1006 = vmatprep.mubr.bf16.mxu0 0
      %1007 = vmatmul.mubr.bf16.gmra.mrb[0].mxu0 %v922
      %v1008 = vpop.f32.mrb[0].mxu0
      %v1009 = vadd.f32 %v433, %v1008
      %v1010 = vpop.f32.mrb[0].mxu0
      %v1011 = vpop.f32.mrb[0].mxu0
      %v1012 = vadd.f32 %v433, %v1011
      %v1013 = vpop.f32.mrb[0].mxu0
      %1014 = vmatprep.mubr.bf16.mxu0 0
      %1015 = vmatmul.mubr.bf16.gmra.mrb[0].mxu0 %v925
      %v1016 = vpop.f32.mrb[0].mxu0
      %v1017 = vadd.f32 %v433, %v1016
      %v1018 = vpop.f32.mrb[0].mxu0
      %v1019 = vpop.f32.mrb[0].mxu0
      %v1020 = vadd.f32 %v433, %v1019
      %v1021 = vpop.f32.mrb[0].mxu0
      %1022 = vmatprep.mubr.bf16.mxu0 0
      %1023 = vmatmul.mubr.bf16.gmra.mrb[0].mxu0 %v928
      %v1024 = vpop.f32.mrb[0].mxu0
      %v1025 = vadd.f32 %v433, %v1024
      %v1026 = vpop.f32.mrb[0].mxu0
      %v1027 = vpop.f32.mrb[0].mxu0
      %v1028 = vadd.f32 %v433, %v1027
      %v1029 = vpop.f32.mrb[0].mxu0
      %1030 = vmatprep.mubr.bf16.mxu0 0
      %1031 = vmatmul.mubr.bf16.gmra.mrb[0].mxu0 %v931
      %v1032 = vpop.f32.mrb[0].mxu0
      %v1033 = vadd.f32 %v433, %v1032
      %v1034 = vpop.f32.mrb[0].mxu0
      %v1035 = vpop.f32.mrb[0].mxu0
      %v1036 = vadd.f32 %v433, %v1035
      %v1037 = vpop.f32.mrb[0].mxu0
      %1038 = vmatprep.mubr.bf16.mxu0 0
      %1039 = vmatmul.mubr.bf16.gmra.mrb[0].mxu0 %v934
      %v1040 = vpop.f32.mrb[0].mxu0
      %v1041 = vadd.f32 %v433, %v1040
      %v1042 = vpop.f32.mrb[0].mxu0
      %v1043 = vpop.f32.mrb[0].mxu0
      %v1044 = vadd.f32 %v433, %v1043
      %v1045 = vpop.f32.mrb[0].mxu0
      %1046 = vmatprep.mubr.bf16.mxu0 0
      %1047 = vmatmul.mubr.bf16.gmra.mrb[0].mxu0 %v937
      %v1048 = vpop.f32.mrb[0].mxu0
      %v1049 = vadd.f32 %v433, %v1048
      %v1050 = vpop.f32.mrb[0].mxu0
      %v1051 = vpop.f32.mrb[0].mxu0
      %v1052 = vadd.f32 %v433, %v1051
      %v1053 = vpop.f32.mrb[0].mxu0
      %1054 = vmatprep.mubr.bf16.mxu0 0
      %1055 = vmatmul.mubr.bf16.gmra.mrb[0].mxu0 %v940
      %v1056 = vpop.f32.mrb[0].mxu0
      %v1057 = vadd.f32 %v433, %v1056
      %v1058 = vpop.f32.mrb[0].mxu0
      %v1059 = vpop.f32.mrb[0].mxu0
      %v1060 = vadd.f32 %v433, %v1059
      %v1061 = vpop.f32.mrb[0].mxu0
      %1062 = vdwg.mxu0
      %1063 = vmax.xlane.f32.xlu0 %v1001
      %v1064 = vpop.xlane.xlu0 %1063
      %1065 = vmax.xlane.f32.xlu0 %v1004
      %v1066 = vpop.xlane.xlu0 %1065
      %1067 = vmax.xlane.f32.xlu0 %v1009
      %v1068 = vpop.xlane.xlu0 %1067
      %1069 = vmax.xlane.f32.xlu0 %v1012
      %v1070 = vpop.xlane.xlu0 %1069
      %1071 = vmax.xlane.f32.xlu0 %v1017
      %v1072 = vpop.xlane.xlu0 %1071
      %1073 = vmax.xlane.f32.xlu0 %v1020
      %v1074 = vpop.xlane.xlu0 %1073
      %1075 = vmax.xlane.f32.xlu0 %v1025
      %v1076 = vpop.xlane.xlu0 %1075
      %1077 = vmax.xlane.f32.xlu0 %v1028
      %v1078 = vpop.xlane.xlu0 %1077
      %1079 = vmax.xlane.f32.xlu0 %v1033
      %v1080 = vpop.xlane.xlu0 %1079
      %1081 = vmax.xlane.f32.xlu0 %v1036
      %v1082 = vpop.xlane.xlu0 %1081
      %1083 = vmax.xlane.f32.xlu0 %v1041
      %v1084 = vpop.xlane.xlu0 %1083
      %1085 = vmax.xlane.f32.xlu0 %v1044
      %v1086 = vpop.xlane.xlu0 %1085
      %1087 = vmax.xlane.f32.xlu0 %v1049
      %v1088 = vpop.xlane.xlu0 %1087
      %1089 = vmax.xlane.f32.xlu0 %v1052
      %v1090 = vpop.xlane.xlu0 %1089
      %1091 = vmax.xlane.f32.xlu0 %v1057
      %v1092 = vpop.xlane.xlu0 %1091
      %1093 = vmax.xlane.f32.xlu0 %v1060
      %v1094 = vpop.xlane.xlu0 %1093
      %v1095 = vsub.f32 %v1001, %v1064
      %v1096 = vsub.f32 %v1004, %v1066
      %v1097 = vsub.f32 %v1009, %v1068
      %v1098 = vsub.f32 %v1012, %v1070
      %v1099 = vsub.f32 %v1017, %v1072
      %v1100 = vsub.f32 %v1020, %v1074
      %v1101 = vsub.f32 %v1025, %v1076
      %v1102 = vsub.f32 %v1028, %v1078
      %v1103 = vsub.f32 %v1033, %v1080
      %v1104 = vsub.f32 %v1036, %v1082
      %v1105 = vsub.f32 %v1041, %v1084
      %v1106 = vsub.f32 %v1044, %v1086
      %v1107 = vsub.f32 %v1049, %v1088
      %v1108 = vsub.f32 %v1052, %v1090
      %v1109 = vsub.f32 %v1057, %v1092
      %v1110 = vsub.f32 %v1060, %v1094
      %v1111 = vmul.f32 %v1095, 1.442695
      %v1112 = vpow.pop %v1111
      %v1113 = vmul.f32 %v1096, 1.442695
      %v1114 = vpow.pop %v1113
      %v1115 = vmul.f32 %v1097, 1.442695
      %v1116 = vpow.pop %v1115
      %v1117 = vmul.f32 %v1098, 1.442695
      %v1118 = vpow.pop %v1117
      %v1119 = vmul.f32 %v1099, 1.442695
      %v1120 = vpow.pop %v1119
      %v1121 = vmul.f32 %v1100, 1.442695
      %v1122 = vpow.pop %v1121
      %v1123 = vmul.f32 %v1101, 1.442695
      %v1124 = vpow.pop %v1123
      %v1125 = vmul.f32 %v1102, 1.442695
      %v1126 = vpow.pop %v1125
      %v1127 = vmul.f32 %v1103, 1.442695
      %v1128 = vpow.pop %v1127
      %v1129 = vmul.f32 %v1104, 1.442695
      %v1130 = vpow.pop %v1129
      %v1131 = vmul.f32 %v1105, 1.442695
      %v1132 = vpow.pop %v1131
      %v1133 = vmul.f32 %v1106, 1.442695
      %v1134 = vpow.pop %v1133
      %v1135 = vmul.f32 %v1107, 1.442695
      %v1136 = vpow.pop %v1135
      %v1137 = vmul.f32 %v1108, 1.442695
      %v1138 = vpow.pop %v1137
      %v1139 = vmul.f32 %v1109, 1.442695
      %v1140 = vpow.pop %v1139
      %v1141 = vmul.f32 %v1110, 1.442695
      %v1142 = vpow.pop %v1141
      %1143 = vadd.xlane.f32.xlu0 %v1112
      %v1144 = vpop.xlane.xlu0 %1143
      %1145 = vadd.xlane.f32.xlu0 %v1114
      %v1146 = vpop.xlane.xlu0 %1145
      %1147 = vadd.xlane.f32.xlu0 %v1116
      %v1148 = vpop.xlane.xlu0 %1147
      %1149 = vadd.xlane.f32.xlu0 %v1118
      %v1150 = vpop.xlane.xlu0 %1149
      %1151 = vadd.xlane.f32.xlu0 %v1120
      %v1152 = vpop.xlane.xlu0 %1151
      %1153 = vadd.xlane.f32.xlu0 %v1122
      %v1154 = vpop.xlane.xlu0 %1153
      %1155 = vadd.xlane.f32.xlu0 %v1124
      %v1156 = vpop.xlane.xlu0 %1155
      %1157 = vadd.xlane.f32.xlu0 %v1126
      %v1158 = vpop.xlane.xlu0 %1157
      %1159 = vadd.xlane.f32.xlu0 %v1128
      %v1160 = vpop.xlane.xlu0 %1159
      %1161 = vadd.xlane.f32.xlu0 %v1130
      %v1162 = vpop.xlane.xlu0 %1161
      %1163 = vadd.xlane.f32.xlu0 %v1132
      %v1164 = vpop.xlane.xlu0 %1163
      %1165 = vadd.xlane.f32.xlu0 %v1134
      %v1166 = vpop.xlane.xlu0 %1165
      %1167 = vadd.xlane.f32.xlu0 %v1136
      %v1168 = vpop.xlane.xlu0 %1167
      %1169 = vadd.xlane.f32.xlu0 %v1138
      %v1170 = vpop.xlane.xlu0 %1169
      %1171 = vadd.xlane.f32.xlu0 %v1140
      %v1172 = vpop.xlane.xlu0 %1171
      %1173 = vadd.xlane.f32.xlu0 %v1142
      %v1174 = vpop.xlane.xlu0 %1173
      %v1175 = vrcp.pop %v1144
      %v1176 = vrcp.pop %v1146
      %v1177 = vrcp.pop %v1148
      %v1178 = vrcp.pop %v1150
      %v1179 = vrcp.pop %v1152
      %v1180 = vrcp.pop %v1154
      %v1181 = vrcp.pop %v1156
      %v1182 = vrcp.pop %v1158
      %v1183 = vrcp.pop %v1160
      %v1184 = vrcp.pop %v1162
      %v1185 = vrcp.pop %v1164
      %v1186 = vrcp.pop %v1166
      %v1187 = vrcp.pop %v1168
      %v1188 = vrcp.pop %v1170
      %v1189 = vrcp.pop %v1172
      %v1190 = vrcp.pop %v1174
      %v1191 = vmul.f32 %v1112, %v1175
      %v1192 = vmul.f32 %v1114, %v1176
      %v1193 = vmul.f32 %v1116, %v1177
      %v1194 = vmul.f32 %v1118, %v1178
      %v1195 = vmul.f32 %v1120, %v1179
      %v1196 = vmul.f32 %v1122, %v1180
      %v1197 = vmul.f32 %v1124, %v1181
      %v1198 = vmul.f32 %v1126, %v1182
      %v1199 = vmul.f32 %v1128, %v1183
      %v1200 = vmul.f32 %v1130, %v1184
      %v1201 = vmul.f32 %v1132, %v1185
      %v1202 = vmul.f32 %v1134, %v1186
      %v1203 = vmul.f32 %v1136, %v1187
      %v1204 = vmul.f32 %v1138, %v1188
      %v1205 = vmul.f32 %v1140, %v1189
      %v1206 = vmul.f32 %v1142, %v1190
      %v1207 = vpack.c.bf16 %v1192, %v1191
      %v1208 = vpack.c.bf16 %v1194, %v1193
      %v1209 = vpack.c.bf16 %v1196, %v1195
      %v1210 = vpack.c.bf16 %v1198, %v1197
      %v1211 = vpack.c.bf16 %v1200, %v1199
      %v1212 = vpack.c.bf16 %v1202, %v1201
      %v1213 = vpack.c.bf16 %v1204, %v1203
      %v1214 = vpack.c.bf16 %v1206, %v1205
      %1215 = vrot.lane.b32.xlu0 %v421, 56
      %v1216 = vpop.permute.xlu0 %1215
      %1217 = vrot.lane.b32.xlu0 %v422, 56
      %v1218 = vpop.permute.xlu0 %1217
      %1219 = vrot.lane.b32.xlu0 %v423, 56
      %v1220 = vpop.permute.xlu0 %1219
      %1221 = vrot.lane.b32.xlu0 %v424, 56
      %v1222 = vpop.permute.xlu0 %1221
      %1223 = vrot.lane.b32.xlu0 %v425, 56
      %v1224 = vpop.permute.xlu0 %1223
      %1225 = vrot.lane.b32.xlu0 %v426, 56
      %v1226 = vpop.permute.xlu0 %1225
      %1227 = vrot.lane.b32.xlu0 %v427, 56
      %v1228 = vpop.permute.xlu0 %1227
      %1229 = vrot.lane.b32.xlu0 %v428, 56
      %v1230 = vpop.permute.xlu0 %1229
      %1239 = vmatprep.subr.bf16.mxu0 0
      %1240 = vmatpush1.bf16.msra.mxu0 %v1216
      %1241 = vmatprep.subr.bf16.mxu0 0
      %1242 = vmatpush1.bf16.msra.mxu0 %v1218
      %1243 = vmatprep.subr.bf16.mxu0 0
      %1244 = vmatpush1.bf16.msra.mxu0 %v1220
      %1245 = vmatprep.subr.bf16.mxu0 0
      %1246 = vmatpush1.bf16.msra.mxu0 %v1222
      %1247 = vmatprep.subr.bf16.mxu0 0
      %1248 = vmatpush1.bf16.msra.mxu0 %v1224
      %1249 = vmatprep.subr.bf16.mxu0 0
      %1250 = vmatpush1.bf16.msra.mxu0 %v1226
      %1251 = vmatprep.subr.bf16.mxu0 0
      %1252 = vmatpush1.bf16.msra.mxu0 %v1228
      %1253 = vmatprep.subr.bf16.mxu0 0
      %1254 = vmatpush1.bf16.msra.mxu0 %v1230
      %1255 = vmatprep.subr.bf16.mxu0 0
      %1256 = vmatpush1.bf16.msra.mxu0 0
      %1257 = vmatprep.subr.bf16.mxu0 0
      %1258 = vmatpush1.bf16.msra.mxu0 0
      %1259 = vmatprep.subr.bf16.mxu0 0
      %1260 = vmatpush1.bf16.msra.mxu0 0
      %1261 = vmatprep.subr.bf16.mxu0 0
      %1262 = vmatpush1.bf16.msra.mxu0 0
      %1263 = vmatprep.subr.bf16.mxu0 0
      %1264 = vmatpush1.bf16.msra.mxu0 0
      %1265 = vmatprep.subr.bf16.mxu0 0
      %1266 = vmatpush1.bf16.msra.mxu0 0
      %1267 = vmatprep.subr.bf16.mxu0 0
      %1268 = vmatpush1.bf16.msra.mxu0 0
      %1269 = vmatprep.subr.bf16.mxu0 0
      %1270 = vmatpush1.bf16.msra.mxu0 0
      %1271 = vmatprep.mubr.bf16.mxu0 0
      %1272 = vmatmul.mubr.bf16.gmra.mrb[0].mxu0 %v1207
      %v1273 = vpop.f32.mrb[0].mxu0
      %v1274 = vadd.f32 0.0, %v1273
      %v1275 = vpop.f32.mrb[0].mxu0
      %v1276 = vpop.f32.mrb[0].mxu0
      %v1277 = vadd.f32 0.0, %v1276
      %v1278 = vpop.f32.mrb[0].mxu0
      %1279 = vmatprep.mubr.bf16.mxu0 0
      %1280 = vmatmul.mubr.bf16.gmra.mrb[0].mxu0 %v1208
      %v1281 = vpop.f32.mrb[0].mxu0
      %v1282 = vadd.f32 0.0, %v1281
      %v1283 = vpop.f32.mrb[0].mxu0
      %v1284 = vpop.f32.mrb[0].mxu0
      %v1285 = vadd.f32 0.0, %v1284
      %v1286 = vpop.f32.mrb[0].mxu0
      %1287 = vmatprep.mubr.bf16.mxu0 0
      %1288 = vmatmul.mubr.bf16.gmra.mrb[0].mxu0 %v1209
      %v1289 = vpop.f32.mrb[0].mxu0
      %v1290 = vadd.f32 0.0, %v1289
      %v1291 = vpop.f32.mrb[0].mxu0
      %v1292 = vpop.f32.mrb[0].mxu0
      %v1293 = vadd.f32 0.0, %v1292
      %v1294 = vpop.f32.mrb[0].mxu0
      %1295 = vmatprep.mubr.bf16.mxu0 0
      %1296 = vmatmul.mubr.bf16.gmra.mrb[0].mxu0 %v1210
      %v1297 = vpop.f32.mrb[0].mxu0
      %v1298 = vadd.f32 0.0, %v1297
      %v1299 = vpop.f32.mrb[0].mxu0
      %v1300 = vpop.f32.mrb[0].mxu0
      %v1301 = vadd.f32 0.0, %v1300
      %v1302 = vpop.f32.mrb[0].mxu0
      %1303 = vmatprep.mubr.bf16.mxu0 0
      %1304 = vmatmul.mubr.bf16.gmra.mrb[0].mxu0 %v1211
      %v1305 = vpop.f32.mrb[0].mxu0
      %v1306 = vadd.f32 0.0, %v1305
      %v1307 = vpop.f32.mrb[0].mxu0
      %v1308 = vpop.f32.mrb[0].mxu0
      %v1309 = vadd.f32 0.0, %v1308
      %v1310 = vpop.f32.mrb[0].mxu0
      %1311 = vmatprep.mubr.bf16.mxu0 0
      %1312 = vmatmul.mubr.bf16.gmra.mrb[0].mxu0 %v1212
      %v1313 = vpop.f32.mrb[0].mxu0
      %v1314 = vadd.f32 0.0, %v1313
      %v1315 = vpop.f32.mrb[0].mxu0
      %v1316 = vpop.f32.mrb[0].mxu0
      %v1317 = vadd.f32 0.0, %v1316
      %v1318 = vpop.f32.mrb[0].mxu0
      %1319 = vmatprep.mubr.bf16.mxu0 0
      %1320 = vmatmul.mubr.bf16.gmra.mrb[0].mxu0 %v1213
      %v1321 = vpop.f32.mrb[0].mxu0
      %v1322 = vadd.f32 0.0, %v1321
      %v1323 = vpop.f32.mrb[0].mxu0
      %v1324 = vpop.f32.mrb[0].mxu0
      %v1325 = vadd.f32 0.0, %v1324
      %v1326 = vpop.f32.mrb[0].mxu0
      %1327 = vmatprep.mubr.bf16.mxu0 0
      %1328 = vmatmul.mubr.bf16.gmra.mrb[0].mxu0 %v1214
      %v1329 = vpop.f32.mrb[0].mxu0
      %v1330 = vadd.f32 0.0, %v1329
      %v1331 = vpop.f32.mrb[0].mxu0
      %v1332 = vpop.f32.mrb[0].mxu0
      %v1333 = vadd.f32 0.0, %v1332
      %v1334 = vpop.f32.mrb[0].mxu0
      %1335 = vdwg.mxu0
      %v1336 = vpack.c.bf16 %v1277, %v1274
      %v1337 = vpack.c.bf16 %v1285, %v1282
      %v1338 = vpack.c.bf16 %v1293, %v1290
      %v1339 = vpack.c.bf16 %v1301, %v1298
      %v1340 = vpack.c.bf16 %v1309, %v1306
      %v1341 = vpack.c.bf16 %v1317, %v1314
      %v1342 = vpack.c.bf16 %v1325, %v1322
      %v1343 = vpack.c.bf16 %v1333, %v1330
      %1344 = vrot.lane.b32.xlu0 %v421, 112
      %v1345 = vpop.permute.xlu0 %1344
      %1346 = vrot.lane.b32.xlu0 %v422, 112
      %v1347 = vpop.permute.xlu0 %1346
      %1348 = vrot.lane.b32.xlu0 %v423, 112
      %v1349 = vpop.permute.xlu0 %1348
      %1350 = vrot.lane.b32.xlu0 %v424, 112
      %v1351 = vpop.permute.xlu0 %1350
      %1352 = vrot.lane.b32.xlu0 %v425, 112
      %v1353 = vpop.permute.xlu0 %1352
      %1354 = vrot.lane.b32.xlu0 %v426, 112
      %v1355 = vpop.permute.xlu0 %1354
      %1356 = vrot.lane.b32.xlu0 %v427, 112
      %v1357 = vpop.permute.xlu0 %1356
      %1358 = vrot.lane.b32.xlu0 %v428, 112
      %v1359 = vpop.permute.xlu0 %1358
      %1360 = vrot.lane.b32.xlu0 %v421, 80
      %v1361 = vpop.permute.xlu0 %1360
      %1362 = vrot.lane.b32.xlu0 %v422, 80
      %v1363 = vpop.permute.xlu0 %1362
      %1364 = vrot.lane.b32.xlu0 %v423, 80
      %v1365 = vpop.permute.xlu0 %1364
      %1366 = vrot.lane.b32.xlu0 %v424, 80
      %v1367 = vpop.permute.xlu0 %1366
      %1368 = vrot.lane.b32.xlu0 %v425, 80
      %v1369 = vpop.permute.xlu0 %1368
      %1370 = vrot.lane.b32.xlu0 %v426, 80
      %v1371 = vpop.permute.xlu0 %1370
      %1372 = vrot.lane.b32.xlu0 %v427, 80
      %v1373 = vpop.permute.xlu0 %1372
      %1374 = vrot.lane.b32.xlu0 %v428, 80
      %v1375 = vpop.permute.xlu0 %1374
      %v1377 = vsel %vm459, %v1345, 0
      %v1380 = vsel %vm459, %v1347, 0
      %v1383 = vsel %vm459, %v1349, 0
      %v1386 = vsel %vm459, %v1351, 0
      %v1389 = vsel %vm459, %v1353, 0
      %v1392 = vsel %vm459, %v1355, 0
      %v1395 = vsel %vm459, %v1357, 0
      %v1398 = vsel %vm459, %v1359, 0
      %v1401 = vsel %vm459, %v1361, 0
      %v1404 = vsel %vm459, %v1363, 0
      %v1407 = vsel %vm459, %v1365, 0
      %v1410 = vsel %vm459, %v1367, 0
      %v1413 = vsel %vm459, %v1369, 0
      %v1416 = vsel %vm459, %v1371, 0
      %v1419 = vsel %vm459, %v1373, 0
      %v1422 = vsel %vm459, %v1375, 0
      %1424 = vmatprep.subr.bf16.mxu0 0
      %1425 = vmatpush1.bf16.xpose.msra.mxu0 %v1401
      %1426 = vmatprep.subr.bf16.mxu0 0
      %1427 = vmatpush1.bf16.xpose.msra.mxu0 %v1404
      %1428 = vmatprep.subr.bf16.mxu0 0
      %1429 = vmatpush1.bf16.xpose.msra.mxu0 %v1407
      %1430 = vmatprep.subr.bf16.mxu0 0
      %1431 = vmatpush1.bf16.xpose.msra.mxu0 %v1410
      %1432 = vmatprep.subr.bf16.mxu0 0
      %1433 = vmatpush1.bf16.xpose.msra.mxu0 %v1413
      %1434 = vmatprep.subr.bf16.mxu0 0
      %1435 = vmatpush1.bf16.xpose.msra.mxu0 %v1416
      %1436 = vmatprep.subr.bf16.mxu0 0
      %1437 = vmatpush1.bf16.xpose.msra.mxu0 %v1419
      %1438 = vmatprep.subr.bf16.mxu0 0
      %1439 = vmatpush1.bf16.xpose.msra.mxu0 %v1422
      %1440 = vmatprep.subr.bf16.mxu0 0
      %1441 = vmatpush1.bf16.xpose.msra.mxu0 0
      %1442 = vmatprep.subr.bf16.mxu0 0
      %1443 = vmatpush1.bf16.xpose.msra.mxu0 0
      %1444 = vmatprep.subr.bf16.mxu0 0
      %1445 = vmatpush1.bf16.xpose.msra.mxu0 0
      %1446 = vmatprep.subr.bf16.mxu0 0
      %1447 = vmatpush1.bf16.xpose.msra.mxu0 0
      %1448 = vmatprep.subr.bf16.mxu0 0
      %1449 = vmatpush1.bf16.xpose.msra.mxu0 0
      %1450 = vmatprep.subr.bf16.mxu0 0
      %1451 = vmatpush1.bf16.xpose.msra.mxu0 0
      %1452 = vmatprep.subr.bf16.mxu0 0
      %1453 = vmatpush1.bf16.xpose.msra.mxu0 0
      %1454 = vmatprep.subr.bf16.mxu0 0
      %1455 = vmatpush1.bf16.xpose.msra.mxu0 0
      %1456 = vmatprep.mubr.bf16.mxu0 0
      %1457 = vmatmul.mubr.bf16.gmra.mrb[0].mxu0 %v1377
      %v1458 = vpop.f32.mrb[0].mxu0
      %v1459 = vadd.f32 %v433, %v1458
      %v1460 = vpop.f32.mrb[0].mxu0
      %v1461 = vpop.f32.mrb[0].mxu0
      %v1462 = vadd.f32 %v433, %v1461
      %v1463 = vpop.f32.mrb[0].mxu0
      %1464 = vmatprep.mubr.bf16.mxu0 0
      %1465 = vmatmul.mubr.bf16.gmra.mrb[0].mxu0 %v1380
      %v1466 = vpop.f32.mrb[0].mxu0
      %v1467 = vadd.f32 %v433, %v1466
      %v1468 = vpop.f32.mrb[0].mxu0
      %v1469 = vpop.f32.mrb[0].mxu0
      %v1470 = vadd.f32 %v433, %v1469
      %v1471 = vpop.f32.mrb[0].mxu0
      %1472 = vmatprep.mubr.bf16.mxu0 0
      %1473 = vmatmul.mubr.bf16.gmra.mrb[0].mxu0 %v1383
      %v1474 = vpop.f32.mrb[0].mxu0
      %v1475 = vadd.f32 %v433, %v1474
      %v1476 = vpop.f32.mrb[0].mxu0
      %v1477 = vpop.f32.mrb[0].mxu0
      %v1478 = vadd.f32 %v433, %v1477
      %v1479 = vpop.f32.mrb[0].mxu0
      %1480 = vmatprep.mubr.bf16.mxu0 0
      %1481 = vmatmul.mubr.bf16.gmra.mrb[0].mxu0 %v1386
      %v1482 = vpop.f32.mrb[0].mxu0
      %v1483 = vadd.f32 %v433, %v1482
      %v1484 = vpop.f32.mrb[0].mxu0
      %v1485 = vpop.f32.mrb[0].mxu0
      %v1486 = vadd.f32 %v433, %v1485
      %v1487 = vpop.f32.mrb[0].mxu0
      %1488 = vmatprep.mubr.bf16.mxu0 0
      %1489 = vmatmul.mubr.bf16.gmra.mrb[0].mxu0 %v1389
      %v1490 = vpop.f32.mrb[0].mxu0
      %v1491 = vadd.f32 %v433, %v1490
      %v1492 = vpop.f32.mrb[0].mxu0
      %v1493 = vpop.f32.mrb[0].mxu0
      %v1494 = vadd.f32 %v433, %v1493
      %v1495 = vpop.f32.mrb[0].mxu0
      %1496 = vmatprep.mubr.bf16.mxu0 0
      %1497 = vmatmul.mubr.bf16.gmra.mrb[0].mxu0 %v1392
      %v1498 = vpop.f32.mrb[0].mxu0
      %v1499 = vadd.f32 %v433, %v1498
      %v1500 = vpop.f32.mrb[0].mxu0
      %v1501 = vpop.f32.mrb[0].mxu0
      %v1502 = vadd.f32 %v433, %v1501
      %v1503 = vpop.f32.mrb[0].mxu0
      %1504 = vmatprep.mubr.bf16.mxu0 0
      %1505 = vmatmul.mubr.bf16.gmra.mrb[0].mxu0 %v1395
      %v1506 = vpop.f32.mrb[0].mxu0
      %v1507 = vadd.f32 %v433, %v1506
      %v1508 = vpop.f32.mrb[0].mxu0
      %v1509 = vpop.f32.mrb[0].mxu0
      %v1510 = vadd.f32 %v433, %v1509
      %v1511 = vpop.f32.mrb[0].mxu0
      %1512 = vmatprep.mubr.bf16.mxu0 0
      %1513 = vmatmul.mubr.bf16.gmra.mrb[0].mxu0 %v1398
      %v1514 = vpop.f32.mrb[0].mxu0
      %v1515 = vadd.f32 %v433, %v1514
      %v1516 = vpop.f32.mrb[0].mxu0
      %v1517 = vpop.f32.mrb[0].mxu0
      %v1518 = vadd.f32 %v433, %v1517
      %v1519 = vpop.f32.mrb[0].mxu0
      %1520 = vdwg.mxu0
      %1521 = vmax.xlane.f32.xlu0 %v1459
      %v1522 = vpop.xlane.xlu0 %1521
      %1523 = vmax.xlane.f32.xlu0 %v1462
      %v1524 = vpop.xlane.xlu0 %1523
      %1525 = vmax.xlane.f32.xlu0 %v1467
      %v1526 = vpop.xlane.xlu0 %1525
      %1527 = vmax.xlane.f32.xlu0 %v1470
      %v1528 = vpop.xlane.xlu0 %1527
      %1529 = vmax.xlane.f32.xlu0 %v1475
      %v1530 = vpop.xlane.xlu0 %1529
      %1531 = vmax.xlane.f32.xlu0 %v1478
      %v1532 = vpop.xlane.xlu0 %1531
      %1533 = vmax.xlane.f32.xlu0 %v1483
      %v1534 = vpop.xlane.xlu0 %1533
      %1535 = vmax.xlane.f32.xlu0 %v1486
      %v1536 = vpop.xlane.xlu0 %1535
      %1537 = vmax.xlane.f32.xlu0 %v1491
      %v1538 = vpop.xlane.xlu0 %1537
      %1539 = vmax.xlane.f32.xlu0 %v1494
      %v1540 = vpop.xlane.xlu0 %1539
      %1541 = vmax.xlane.f32.xlu0 %v1499
      %v1542 = vpop.xlane.xlu0 %1541
      %1543 = vmax.xlane.f32.xlu0 %v1502
      %v1544 = vpop.xlane.xlu0 %1543
      %1545 = vmax.xlane.f32.xlu0 %v1507
      %v1546 = vpop.xlane.xlu0 %1545
      %1547 = vmax.xlane.f32.xlu0 %v1510
      %v1548 = vpop.xlane.xlu0 %1547
      %1549 = vmax.xlane.f32.xlu0 %v1515
      %v1550 = vpop.xlane.xlu0 %1549
      %1551 = vmax.xlane.f32.xlu0 %v1518
      %v1552 = vpop.xlane.xlu0 %1551
      %v1553 = vsub.f32 %v1459, %v1522
      %v1554 = vsub.f32 %v1462, %v1524
      %v1555 = vsub.f32 %v1467, %v1526
      %v1556 = vsub.f32 %v1470, %v1528
      %v1557 = vsub.f32 %v1475, %v1530
      %v1558 = vsub.f32 %v1478, %v1532
      %v1559 = vsub.f32 %v1483, %v1534
      %v1560 = vsub.f32 %v1486, %v1536
      %v1561 = vsub.f32 %v1491, %v1538
      %v1562 = vsub.f32 %v1494, %v1540
      %v1563 = vsub.f32 %v1499, %v1542
      %v1564 = vsub.f32 %v1502, %v1544
      %v1565 = vsub.f32 %v1507, %v1546
      %v1566 = vsub.f32 %v1510, %v1548
      %v1567 = vsub.f32 %v1515, %v1550
      %v1568 = vsub.f32 %v1518, %v1552
      %v1569 = vmul.f32 %v1553, 1.442695
      %v1570 = vpow.pop %v1569
      %v1571 = vmul.f32 %v1554, 1.442695
      %v1572 = vpow.pop %v1571
      %v1573 = vmul.f32 %v1555, 1.442695
      %v1574 = vpow.pop %v1573
      %v1575 = vmul.f32 %v1556, 1.442695
      %v1576 = vpow.pop %v1575
      %v1577 = vmul.f32 %v1557, 1.442695
      %v1578 = vpow.pop %v1577
      %v1579 = vmul.f32 %v1558, 1.442695
      %v1580 = vpow.pop %v1579
      %v1581 = vmul.f32 %v1559, 1.442695
      %v1582 = vpow.pop %v1581
      %v1583 = vmul.f32 %v1560, 1.442695
      %v1584 = vpow.pop %v1583
      %v1585 = vmul.f32 %v1561, 1.442695
      %v1586 = vpow.pop %v1585
      %v1587 = vmul.f32 %v1562, 1.442695
      %v1588 = vpow.pop %v1587
      %v1589 = vmul.f32 %v1563, 1.442695
      %v1590 = vpow.pop %v1589
      %v1591 = vmul.f32 %v1564, 1.442695
      %v1592 = vpow.pop %v1591
      %v1593 = vmul.f32 %v1565, 1.442695
      %v1594 = vpow.pop %v1593
      %v1595 = vmul.f32 %v1566, 1.442695
      %v1596 = vpow.pop %v1595
      %v1597 = vmul.f32 %v1567, 1.442695
      %v1598 = vpow.pop %v1597
      %v1599 = vmul.f32 %v1568, 1.442695
      %v1600 = vpow.pop %v1599
      %1601 = vadd.xlane.f32.xlu0 %v1570
      %v1602 = vpop.xlane.xlu0 %1601
      %1603 = vadd.xlane.f32.xlu0 %v1572
      %v1604 = vpop.xlane.xlu0 %1603
      %1605 = vadd.xlane.f32.xlu0 %v1574
      %v1606 = vpop.xlane.xlu0 %1605
      %1607 = vadd.xlane.f32.xlu0 %v1576
      %v1608 = vpop.xlane.xlu0 %1607
      %1609 = vadd.xlane.f32.xlu0 %v1578
      %v1610 = vpop.xlane.xlu0 %1609
      %1611 = vadd.xlane.f32.xlu0 %v1580
      %v1612 = vpop.xlane.xlu0 %1611
      %1613 = vadd.xlane.f32.xlu0 %v1582
      %v1614 = vpop.xlane.xlu0 %1613
      %1615 = vadd.xlane.f32.xlu0 %v1584
      %v1616 = vpop.xlane.xlu0 %1615
      %1617 = vadd.xlane.f32.xlu0 %v1586
      %v1618 = vpop.xlane.xlu0 %1617
      %1619 = vadd.xlane.f32.xlu0 %v1588
      %v1620 = vpop.xlane.xlu0 %1619
      %1621 = vadd.xlane.f32.xlu0 %v1590
      %v1622 = vpop.xlane.xlu0 %1621
      %1623 = vadd.xlane.f32.xlu0 %v1592
      %v1624 = vpop.xlane.xlu0 %1623
      %1625 = vadd.xlane.f32.xlu0 %v1594
      %v1626 = vpop.xlane.xlu0 %1625
      %1627 = vadd.xlane.f32.xlu0 %v1596
      %v1628 = vpop.xlane.xlu0 %1627
      %1629 = vadd.xlane.f32.xlu0 %v1598
      %v1630 = vpop.xlane.xlu0 %1629
      %1631 = vadd.xlane.f32.xlu0 %v1600
      %v1632 = vpop.xlane.xlu0 %1631
      %v1633 = vrcp.pop %v1602
      %v1634 = vrcp.pop %v1604
      %v1635 = vrcp.pop %v1606
      %v1636 = vrcp.pop %v1608
      %v1637 = vrcp.pop %v1610
      %v1638 = vrcp.pop %v1612
      %v1639 = vrcp.pop %v1614
      %v1640 = vrcp.pop %v1616
      %v1641 = vrcp.pop %v1618
      %v1642 = vrcp.pop %v1620
      %v1643 = vrcp.pop %v1622
      %v1644 = vrcp.pop %v1624
      %v1645 = vrcp.pop %v1626
      %v1646 = vrcp.pop %v1628
      %v1647 = vrcp.pop %v1630
      %v1648 = vrcp.pop %v1632
      %v1649 = vmul.f32 %v1570, %v1633
      %v1650 = vmul.f32 %v1572, %v1634
      %v1651 = vmul.f32 %v1574, %v1635
      %v1652 = vmul.f32 %v1576, %v1636
      %v1653 = vmul.f32 %v1578, %v1637
      %v1654 = vmul.f32 %v1580, %v1638
      %v1655 = vmul.f32 %v1582, %v1639
      %v1656 = vmul.f32 %v1584, %v1640
      %v1657 = vmul.f32 %v1586, %v1641
      %v1658 = vmul.f32 %v1588, %v1642
      %v1659 = vmul.f32 %v1590, %v1643
      %v1660 = vmul.f32 %v1592, %v1644
      %v1661 = vmul.f32 %v1594, %v1645
      %v1662 = vmul.f32 %v1596, %v1646
      %v1663 = vmul.f32 %v1598, %v1647
      %v1664 = vmul.f32 %v1600, %v1648
      %v1665 = vpack.c.bf16 %v1650, %v1649
      %v1666 = vpack.c.bf16 %v1652, %v1651
      %v1667 = vpack.c.bf16 %v1654, %v1653
      %v1668 = vpack.c.bf16 %v1656, %v1655
      %v1669 = vpack.c.bf16 %v1658, %v1657
      %v1670 = vpack.c.bf16 %v1660, %v1659
      %v1671 = vpack.c.bf16 %v1662, %v1661
      %v1672 = vpack.c.bf16 %v1664, %v1663
      %1673 = vrot.lane.b32.xlu0 %v421, 48
      %v1674 = vpop.permute.xlu0 %1673
      %1675 = vrot.lane.b32.xlu0 %v422, 48
      %v1676 = vpop.permute.xlu0 %1675
      %1677 = vrot.lane.b32.xlu0 %v423, 48
      %v1678 = vpop.permute.xlu0 %1677
      %1679 = vrot.lane.b32.xlu0 %v424, 48
      %v1680 = vpop.permute.xlu0 %1679
      %1681 = vrot.lane.b32.xlu0 %v425, 48
      %v1682 = vpop.permute.xlu0 %1681
      %1683 = vrot.lane.b32.xlu0 %v426, 48
      %v1684 = vpop.permute.xlu0 %1683
      %1685 = vrot.lane.b32.xlu0 %v427, 48
      %v1686 = vpop.permute.xlu0 %1685
      %1687 = vrot.lane.b32.xlu0 %v428, 48
      %v1688 = vpop.permute.xlu0 %1687
      %1697 = vmatprep.subr.bf16.mxu0 0
      %1698 = vmatpush1.bf16.msra.mxu0 %v1674
      %1699 = vmatprep.subr.bf16.mxu0 0
      %1700 = vmatpush1.bf16.msra.mxu0 %v1676
      %1701 = vmatprep.subr.bf16.mxu0 0
      %1702 = vmatpush1.bf16.msra.mxu0 %v1678
      %1703 = vmatprep.subr.bf16.mxu0 0
      %1704 = vmatpush1.bf16.msra.mxu0 %v1680
      %1705 = vmatprep.subr.bf16.mxu0 0
      %1706 = vmatpush1.bf16.msra.mxu0 %v1682
      %1707 = vmatprep.subr.bf16.mxu0 0
      %1708 = vmatpush1.bf16.msra.mxu0 %v1684
      %1709 = vmatprep.subr.bf16.mxu0 0
      %1710 = vmatpush1.bf16.msra.mxu0 %v1686
      %1711 = vmatprep.subr.bf16.mxu0 0
      %1712 = vmatpush1.bf16.msra.mxu0 %v1688
      %1713 = vmatprep.subr.bf16.mxu0 0
      %1714 = vmatpush1.bf16.msra.mxu0 0
      %1715 = vmatprep.subr.bf16.mxu0 0
      %1716 = vmatpush1.bf16.msra.mxu0 0
      %1717 = vmatprep.subr.bf16.mxu0 0
      %1718 = vmatpush1.bf16.msra.mxu0 0
      %1719 = vmatprep.subr.bf16.mxu0 0
      %1720 = vmatpush1.bf16.msra.mxu0 0
      %1721 = vmatprep.subr.bf16.mxu0 0
      %1722 = vmatpush1.bf16.msra.mxu0 0
      %1723 = vmatprep.subr.bf16.mxu0 0
      %1724 = vmatpush1.bf16.msra.mxu0 0
      %1725 = vmatprep.subr.bf16.mxu0 0
      %1726 = vmatpush1.bf16.msra.mxu0 0
      %1727 = vmatprep.subr.bf16.mxu0 0
      %1728 = vmatpush1.bf16.msra.mxu0 0
      %1729 = vmatprep.mubr.bf16.mxu0 0
      %1730 = vmatmul.mubr.bf16.gmra.mrb[0].mxu0 %v1665
      %v1731 = vpop.f32.mrb[0].mxu0
      %v1732 = vadd.f32 0.0, %v1731
      %v1733 = vpop.f32.mrb[0].mxu0
      %v1734 = vpop.f32.mrb[0].mxu0
      %v1735 = vadd.f32 0.0, %v1734
      %v1736 = vpop.f32.mrb[0].mxu0
      %1737 = vmatprep.mubr.bf16.mxu0 0
      %1738 = vmatmul.mubr.bf16.gmra.mrb[0].mxu0 %v1666
      %v1739 = vpop.f32.mrb[0].mxu0
      %v1740 = vadd.f32 0.0, %v1739
      %v1741 = vpop.f32.mrb[0].mxu0
      %v1742 = vpop.f32.mrb[0].mxu0
      %v1743 = vadd.f32 0.0, %v1742
      %v1744 = vpop.f32.mrb[0].mxu0
      %1745 = vmatprep.mubr.bf16.mxu0 0
      %1746 = vmatmul.mubr.bf16.gmra.mrb[0].mxu0 %v1667
      %v1747 = vpop.f32.mrb[0].mxu0
      %v1748 = vadd.f32 0.0, %v1747
      %v1749 = vpop.f32.mrb[0].mxu0
      %v1750 = vpop.f32.mrb[0].mxu0
      %v1751 = vadd.f32 0.0, %v1750
      %v1752 = vpop.f32.mrb[0].mxu0
      %1753 = vmatprep.mubr.bf16.mxu0 0
      %1754 = vmatmul.mubr.bf16.gmra.mrb[0].mxu0 %v1668
      %v1755 = vpop.f32.mrb[0].mxu0
      %v1756 = vadd.f32 0.0, %v1755
      %v1757 = vpop.f32.mrb[0].mxu0
      %v1758 = vpop.f32.mrb[0].mxu0
      %v1759 = vadd.f32 0.0, %v1758
      %v1760 = vpop.f32.mrb[0].mxu0
      %1761 = vmatprep.mubr.bf16.mxu0 0
      %1762 = vmatmul.mubr.bf16.gmra.mrb[0].mxu0 %v1669
      %v1763 = vpop.f32.mrb[0].mxu0
      %v1764 = vadd.f32 0.0, %v1763
      %v1765 = vpop.f32.mrb[0].mxu0
      %v1766 = vpop.f32.mrb[0].mxu0
      %v1767 = vadd.f32 0.0, %v1766
      %v1768 = vpop.f32.mrb[0].mxu0
      %1769 = vmatprep.mubr.bf16.mxu0 0
      %1770 = vmatmul.mubr.bf16.gmra.mrb[0].mxu0 %v1670
      %v1771 = vpop.f32.mrb[0].mxu0
      %v1772 = vadd.f32 0.0, %v1771
      %v1773 = vpop.f32.mrb[0].mxu0
      %v1774 = vpop.f32.mrb[0].mxu0
      %v1775 = vadd.f32 0.0, %v1774
      %v1776 = vpop.f32.mrb[0].mxu0
      %1777 = vmatprep.mubr.bf16.mxu0 0
      %1778 = vmatmul.mubr.bf16.gmra.mrb[0].mxu0 %v1671
      %v1779 = vpop.f32.mrb[0].mxu0
      %v1780 = vadd.f32 0.0, %v1779
      %v1781 = vpop.f32.mrb[0].mxu0
      %v1782 = vpop.f32.mrb[0].mxu0
      %v1783 = vadd.f32 0.0, %v1782
      %v1784 = vpop.f32.mrb[0].mxu0
      %1785 = vmatprep.mubr.bf16.mxu0 0
      %1786 = vmatmul.mubr.bf16.gmra.mrb[0].mxu0 %v1672
      %v1787 = vpop.f32.mrb[0].mxu0
      %v1788 = vadd.f32 0.0, %v1787
      %v1789 = vpop.f32.mrb[0].mxu0
      %v1790 = vpop.f32.mrb[0].mxu0
      %v1791 = vadd.f32 0.0, %v1790
      %v1792 = vpop.f32.mrb[0].mxu0
      %1793 = vdwg.mxu0
      %v1794 = vpack.c.bf16 %v1735, %v1732
      %v1795 = vpack.c.bf16 %v1743, %v1740
      %v1796 = vpack.c.bf16 %v1751, %v1748
      %v1797 = vpack.c.bf16 %v1759, %v1756
      %v1798 = vpack.c.bf16 %v1767, %v1764
      %v1799 = vpack.c.bf16 %v1775, %v1772
      %v1800 = vpack.c.bf16 %v1783, %v1780
      %v1801 = vpack.c.bf16 %v1791, %v1788
      %1802 = vrot.lane.b32.xlu0 %v421, 104
      %v1803 = vpop.permute.xlu0 %1802
      %1804 = vrot.lane.b32.xlu0 %v422, 104
      %v1805 = vpop.permute.xlu0 %1804
      %1806 = vrot.lane.b32.xlu0 %v423, 104
      %v1807 = vpop.permute.xlu0 %1806
      %1808 = vrot.lane.b32.xlu0 %v424, 104
      %v1809 = vpop.permute.xlu0 %1808
      %1810 = vrot.lane.b32.xlu0 %v425, 104
      %v1811 = vpop.permute.xlu0 %1810
      %1812 = vrot.lane.b32.xlu0 %v426, 104
      %v1813 = vpop.permute.xlu0 %1812
      %1814 = vrot.lane.b32.xlu0 %v427, 104
      %v1815 = vpop.permute.xlu0 %1814
      %1816 = vrot.lane.b32.xlu0 %v428, 104
      %v1817 = vpop.permute.xlu0 %1816
      %1818 = vrot.lane.b32.xlu0 %v421, 72
      %v1819 = vpop.permute.xlu0 %1818
      %1820 = vrot.lane.b32.xlu0 %v422, 72
      %v1821 = vpop.permute.xlu0 %1820
      %1822 = vrot.lane.b32.xlu0 %v423, 72
      %v1823 = vpop.permute.xlu0 %1822
      %1824 = vrot.lane.b32.xlu0 %v424, 72
      %v1825 = vpop.permute.xlu0 %1824
      %1826 = vrot.lane.b32.xlu0 %v425, 72
      %v1827 = vpop.permute.xlu0 %1826
      %1828 = vrot.lane.b32.xlu0 %v426, 72
      %v1829 = vpop.permute.xlu0 %1828
      %1830 = vrot.lane.b32.xlu0 %v427, 72
      %v1831 = vpop.permute.xlu0 %1830
      %1832 = vrot.lane.b32.xlu0 %v428, 72
      %v1833 = vpop.permute.xlu0 %1832
      %v1835 = vsel %vm459, %v1803, 0
      %v1838 = vsel %vm459, %v1805, 0
      %v1841 = vsel %vm459, %v1807, 0
      %v1844 = vsel %vm459, %v1809, 0
      %v1847 = vsel %vm459, %v1811, 0
      %v1850 = vsel %vm459, %v1813, 0
      %v1853 = vsel %vm459, %v1815, 0
      %v1856 = vsel %vm459, %v1817, 0
      %v1859 = vsel %vm459, %v1819, 0
      %v1862 = vsel %vm459, %v1821, 0
      %v1865 = vsel %vm459, %v1823, 0
      %v1868 = vsel %vm459, %v1825, 0
      %v1871 = vsel %vm459, %v1827, 0
      %v1874 = vsel %vm459, %v1829, 0
      %v1877 = vsel %vm459, %v1831, 0
      %v1880 = vsel %vm459, %v1833, 0
      %1882 = vmatprep.subr.bf16.mxu0 0
      %1883 = vmatpush1.bf16.xpose.msra.mxu0 %v1859
      %1884 = vmatprep.subr.bf16.mxu0 0
      %1885 = vmatpush1.bf16.xpose.msra.mxu0 %v1862
      %1886 = vmatprep.subr.bf16.mxu0 0
      %1887 = vmatpush1.bf16.xpose.msra.mxu0 %v1865
      %1888 = vmatprep.subr.bf16.mxu0 0
      %1889 = vmatpush1.bf16.xpose.msra.mxu0 %v1868
      %1890 = vmatprep.subr.bf16.mxu0 0
      %1891 = vmatpush1.bf16.xpose.msra.mxu0 %v1871
      %1892 = vmatprep.subr.bf16.mxu0 0
      %1893 = vmatpush1.bf16.xpose.msra.mxu0 %v1874
      %1894 = vmatprep.subr.bf16.mxu0 0
      %1895 = vmatpush1.bf16.xpose.msra.mxu0 %v1877
      %1896 = vmatprep.subr.bf16.mxu0 0
      %1897 = vmatpush1.bf16.xpose.msra.mxu0 %v1880
      %1898 = vmatprep.subr.bf16.mxu0 0
      %1899 = vmatpush1.bf16.xpose.msra.mxu0 0
      %1900 = vmatprep.subr.bf16.mxu0 0
      %1901 = vmatpush1.bf16.xpose.msra.mxu0 0
      %1902 = vmatprep.subr.bf16.mxu0 0
      %1903 = vmatpush1.bf16.xpose.msra.mxu0 0
      %1904 = vmatprep.subr.bf16.mxu0 0
      %1905 = vmatpush1.bf16.xpose.msra.mxu0 0
      %1906 = vmatprep.subr.bf16.mxu0 0
      %1907 = vmatpush1.bf16.xpose.msra.mxu0 0
      %1908 = vmatprep.subr.bf16.mxu0 0
      %1909 = vmatpush1.bf16.xpose.msra.mxu0 0
      %1910 = vmatprep.subr.bf16.mxu0 0
      %1911 = vmatpush1.bf16.xpose.msra.mxu0 0
      %1912 = vmatprep.subr.bf16.mxu0 0
      %1913 = vmatpush1.bf16.xpose.msra.mxu0 0
      %1914 = vmatprep.mubr.bf16.mxu0 0
      %1915 = vmatmul.mubr.bf16.gmra.mrb[0].mxu0 %v1835
      %v1916 = vpop.f32.mrb[0].mxu0
      %v1917 = vadd.f32 %v433, %v1916
      %v1918 = vpop.f32.mrb[0].mxu0
      %v1919 = vpop.f32.mrb[0].mxu0
      %v1920 = vadd.f32 %v433, %v1919
      %v1921 = vpop.f32.mrb[0].mxu0
      %1922 = vmatprep.mubr.bf16.mxu0 0
      %1923 = vmatmul.mubr.bf16.gmra.mrb[0].mxu0 %v1838
      %v1924 = vpop.f32.mrb[0].mxu0
      %v1925 = vadd.f32 %v433, %v1924
      %v1926 = vpop.f32.mrb[0].mxu0
      %v1927 = vpop.f32.mrb[0].mxu0
      %v1928 = vadd.f32 %v433, %v1927
      %v1929 = vpop.f32.mrb[0].mxu0
      %1930 = vmatprep.mubr.bf16.mxu0 0
      %1931 = vmatmul.mubr.bf16.gmra.mrb[0].mxu0 %v1841
      %v1932 = vpop.f32.mrb[0].mxu0
      %v1933 = vadd.f32 %v433, %v1932
      %v1934 = vpop.f32.mrb[0].mxu0
      %v1935 = vpop.f32.mrb[0].mxu0
      %v1936 = vadd.f32 %v433, %v1935
      %v1937 = vpop.f32.mrb[0].mxu0
      %1938 = vmatprep.mubr.bf16.mxu0 0
      %1939 = vmatmul.mubr.bf16.gmra.mrb[0].mxu0 %v1844
      %v1940 = vpop.f32.mrb[0].mxu0
      %v1941 = vadd.f32 %v433, %v1940
      %v1942 = vpop.f32.mrb[0].mxu0
      %v1943 = vpop.f32.mrb[0].mxu0
      %v1944 = vadd.f32 %v433, %v1943
      %v1945 = vpop.f32.mrb[0].mxu0
      %1946 = vmatprep.mubr.bf16.mxu0 0
      %1947 = vmatmul.mubr.bf16.gmra.mrb[0].mxu0 %v1847
      %v1948 = vpop.f32.mrb[0].mxu0
      %v1949 = vadd.f32 %v433, %v1948
      %v1950 = vpop.f32.mrb[0].mxu0
      %v1951 = vpop.f32.mrb[0].mxu0
      %v1952 = vadd.f32 %v433, %v1951
      %v1953 = vpop.f32.mrb[0].mxu0
      %1954 = vmatprep.mubr.bf16.mxu0 0
      %1955 = vmatmul.mubr.bf16.gmra.mrb[0].mxu0 %v1850
      %v1956 = vpop.f32.mrb[0].mxu0
      %v1957 = vadd.f32 %v433, %v1956
      %v1958 = vpop.f32.mrb[0].mxu0
      %v1959 = vpop.f32.mrb[0].mxu0
      %v1960 = vadd.f32 %v433, %v1959
      %v1961 = vpop.f32.mrb[0].mxu0
      %1962 = vmatprep.mubr.bf16.mxu0 0
      %1963 = vmatmul.mubr.bf16.gmra.mrb[0].mxu0 %v1853
      %v1964 = vpop.f32.mrb[0].mxu0
      %v1965 = vadd.f32 %v433, %v1964
      %v1966 = vpop.f32.mrb[0].mxu0
      %v1967 = vpop.f32.mrb[0].mxu0
      %v1968 = vadd.f32 %v433, %v1967
      %v1969 = vpop.f32.mrb[0].mxu0
      %1970 = vmatprep.mubr.bf16.mxu0 0
      %1971 = vmatmul.mubr.bf16.gmra.mrb[0].mxu0 %v1856
      %v1972 = vpop.f32.mrb[0].mxu0
      %v1973 = vadd.f32 %v433, %v1972
      %v1974 = vpop.f32.mrb[0].mxu0
      %v1975 = vpop.f32.mrb[0].mxu0
      %v1976 = vadd.f32 %v433, %v1975
      %v1977 = vpop.f32.mrb[0].mxu0
      %1978 = vdwg.mxu0
      %1979 = vmax.xlane.f32.xlu0 %v1917
      %v1980 = vpop.xlane.xlu0 %1979
      %1981 = vmax.xlane.f32.xlu0 %v1920
      %v1982 = vpop.xlane.xlu0 %1981
      %1983 = vmax.xlane.f32.xlu0 %v1925
      %v1984 = vpop.xlane.xlu0 %1983
      %1985 = vmax.xlane.f32.xlu0 %v1928
      %v1986 = vpop.xlane.xlu0 %1985
      %1987 = vmax.xlane.f32.xlu0 %v1933
      %v1988 = vpop.xlane.xlu0 %1987
      %1989 = vmax.xlane.f32.xlu0 %v1936
      %v1990 = vpop.xlane.xlu0 %1989
      %1991 = vmax.xlane.f32.xlu0 %v1941
      %v1992 = vpop.xlane.xlu0 %1991
      %1993 = vmax.xlane.f32.xlu0 %v1944
      %v1994 = vpop.xlane.xlu0 %1993
      %1995 = vmax.xlane.f32.xlu0 %v1949
      %v1996 = vpop.xlane.xlu0 %1995
      %1997 = vmax.xlane.f32.xlu0 %v1952
      %v1998 = vpop.xlane.xlu0 %1997
      %1999 = vmax.xlane.f32.xlu0 %v1957
      %v2000 = vpop.xlane.xlu0 %1999
      %2001 = vmax.xlane.f32.xlu0 %v1960
      %v2002 = vpop.xlane.xlu0 %2001
      %2003 = vmax.xlane.f32.xlu0 %v1965
      %v2004 = vpop.xlane.xlu0 %2003
      %2005 = vmax.xlane.f32.xlu0 %v1968
      %v2006 = vpop.xlane.xlu0 %2005
      %2007 = vmax.xlane.f32.xlu0 %v1973
      %v2008 = vpop.xlane.xlu0 %2007
      %2009 = vmax.xlane.f32.xlu0 %v1976
      %v2010 = vpop.xlane.xlu0 %2009
      %v2011 = vsub.f32 %v1917, %v1980
      %v2012 = vsub.f32 %v1920, %v1982
      %v2013 = vsub.f32 %v1925, %v1984
      %v2014 = vsub.f32 %v1928, %v1986
      %v2015 = vsub.f32 %v1933, %v1988
      %v2016 = vsub.f32 %v1936, %v1990
      %v2017 = vsub.f32 %v1941, %v1992
      %v2018 = vsub.f32 %v1944, %v1994
      %v2019 = vsub.f32 %v1949, %v1996
      %v2020 = vsub.f32 %v1952, %v1998
      %v2021 = vsub.f32 %v1957, %v2000
      %v2022 = vsub.f32 %v1960, %v2002
      %v2023 = vsub.f32 %v1965, %v2004
      %v2024 = vsub.f32 %v1968, %v2006
      %v2025 = vsub.f32 %v1973, %v2008
      %v2026 = vsub.f32 %v1976, %v2010
      %v2027 = vmul.f32 %v2011, 1.442695
      %v2028 = vpow.pop %v2027
      %v2029 = vmul.f32 %v2012, 1.442695
      %v2030 = vpow.pop %v2029
      %v2031 = vmul.f32 %v2013, 1.442695
      %v2032 = vpow.pop %v2031
      %v2033 = vmul.f32 %v2014, 1.442695
      %v2034 = vpow.pop %v2033
      %v2035 = vmul.f32 %v2015, 1.442695
      %v2036 = vpow.pop %v2035
      %v2037 = vmul.f32 %v2016, 1.442695
      %v2038 = vpow.pop %v2037
      %v2039 = vmul.f32 %v2017, 1.442695
      %v2040 = vpow.pop %v2039
      %v2041 = vmul.f32 %v2018, 1.442695
      %v2042 = vpow.pop %v2041
      %v2043 = vmul.f32 %v2019, 1.442695
      %v2044 = vpow.pop %v2043
      %v2045 = vmul.f32 %v2020, 1.442695
      %v2046 = vpow.pop %v2045
      %v2047 = vmul.f32 %v2021, 1.442695
      %v2048 = vpow.pop %v2047
      %v2049 = vmul.f32 %v2022, 1.442695
      %v2050 = vpow.pop %v2049
      %v2051 = vmul.f32 %v2023, 1.442695
      %v2052 = vpow.pop %v2051
      %v2053 = vmul.f32 %v2024, 1.442695
      %v2054 = vpow.pop %v2053
      %v2055 = vmul.f32 %v2025, 1.442695
      %v2056 = vpow.pop %v2055
      %v2057 = vmul.f32 %v2026, 1.442695
      %v2058 = vpow.pop %v2057
      %2059 = vadd.xlane.f32.xlu0 %v2028
      %v2060 = vpop.xlane.xlu0 %2059
      %2061 = vadd.xlane.f32.xlu0 %v2030
      %v2062 = vpop.xlane.xlu0 %2061
      %2063 = vadd.xlane.f32.xlu0 %v2032
      %v2064 = vpop.xlane.xlu0 %2063
      %2065 = vadd.xlane.f32.xlu0 %v2034
      %v2066 = vpop.xlane.xlu0 %2065
      %2067 = vadd.xlane.f32.xlu0 %v2036
      %v2068 = vpop.xlane.xlu0 %2067
      %2069 = vadd.xlane.f32.xlu0 %v2038
      %v2070 = vpop.xlane.xlu0 %2069
      %2071 = vadd.xlane.f32.xlu0 %v2040
      %v2072 = vpop.xlane.xlu0 %2071
      %2073 = vadd.xlane.f32.xlu0 %v2042
      %v2074 = vpop.xlane.xlu0 %2073
      %2075 = vadd.xlane.f32.xlu0 %v2044
      %v2076 = vpop.xlane.xlu0 %2075
      %2077 = vadd.xlane.f32.xlu0 %v2046
      %v2078 = vpop.xlane.xlu0 %2077
      %2079 = vadd.xlane.f32.xlu0 %v2048
      %v2080 = vpop.xlane.xlu0 %2079
      %2081 = vadd.xlane.f32.xlu0 %v2050
      %v2082 = vpop.xlane.xlu0 %2081
      %2083 = vadd.xlane.f32.xlu0 %v2052
      %v2084 = vpop.xlane.xlu0 %2083
      %2085 = vadd.xlane.f32.xlu0 %v2054
      %v2086 = vpop.xlane.xlu0 %2085
      %2087 = vadd.xlane.f32.xlu0 %v2056
      %v2088 = vpop.xlane.xlu0 %2087
      %2089 = vadd.xlane.f32.xlu0 %v2058
      %v2090 = vpop.xlane.xlu0 %2089
      %v2091 = vrcp.pop %v2060
      %v2092 = vrcp.pop %v2062
      %v2093 = vrcp.pop %v2064
      %v2094 = vrcp.pop %v2066
      %v2095 = vrcp.pop %v2068
      %v2096 = vrcp.pop %v2070
      %v2097 = vrcp.pop %v2072
      %v2098 = vrcp.pop %v2074
      %v2099 = vrcp.pop %v2076
      %v2100 = vrcp.pop %v2078
      %v2101 = vrcp.pop %v2080
      %v2102 = vrcp.pop %v2082
      %v2103 = vrcp.pop %v2084
      %v2104 = vrcp.pop %v2086
      %v2105 = vrcp.pop %v2088
      %v2106 = vrcp.pop %v2090
      %v2107 = vmul.f32 %v2028, %v2091
      %v2108 = vmul.f32 %v2030, %v2092
      %v2109 = vmul.f32 %v2032, %v2093
      %v2110 = vmul.f32 %v2034, %v2094
      %v2111 = vmul.f32 %v2036, %v2095
      %v2112 = vmul.f32 %v2038, %v2096
      %v2113 = vmul.f32 %v2040, %v2097
      %v2114 = vmul.f32 %v2042, %v2098
      %v2115 = vmul.f32 %v2044, %v2099
      %v2116 = vmul.f32 %v2046, %v2100
      %v2117 = vmul.f32 %v2048, %v2101
      %v2118 = vmul.f32 %v2050, %v2102
      %v2119 = vmul.f32 %v2052, %v2103
      %v2120 = vmul.f32 %v2054, %v2104
      %v2121 = vmul.f32 %v2056, %v2105
      %v2122 = vmul.f32 %v2058, %v2106
      %v2123 = vpack.c.bf16 %v2108, %v2107
      %v2124 = vpack.c.bf16 %v2110, %v2109
      %v2125 = vpack.c.bf16 %v2112, %v2111
      %v2126 = vpack.c.bf16 %v2114, %v2113
      %v2127 = vpack.c.bf16 %v2116, %v2115
      %v2128 = vpack.c.bf16 %v2118, %v2117
      %v2129 = vpack.c.bf16 %v2120, %v2119
      %v2130 = vpack.c.bf16 %v2122, %v2121
      %2131 = vrot.lane.b32.xlu0 %v421, 40
      %v2132 = vpop.permute.xlu0 %2131
      %2133 = vrot.lane.b32.xlu0 %v422, 40
      %v2134 = vpop.permute.xlu0 %2133
      %2135 = vrot.lane.b32.xlu0 %v423, 40
      %v2136 = vpop.permute.xlu0 %2135
      %2137 = vrot.lane.b32.xlu0 %v424, 40
      %v2138 = vpop.permute.xlu0 %2137
      %2139 = vrot.lane.b32.xlu0 %v425, 40
      %v2140 = vpop.permute.xlu0 %2139
      %2141 = vrot.lane.b32.xlu0 %v426, 40
      %v2142 = vpop.permute.xlu0 %2141
      %2143 = vrot.lane.b32.xlu0 %v427, 40
      %v2144 = vpop.permute.xlu0 %2143
      %2145 = vrot.lane.b32.xlu0 %v428, 40
      %v2146 = vpop.permute.xlu0 %2145
      %2155 = vmatprep.subr.bf16.mxu0 0
      %2156 = vmatpush1.bf16.msra.mxu0 %v2132
      %2157 = vmatprep.subr.bf16.mxu0 0
      %2158 = vmatpush1.bf16.msra.mxu0 %v2134
      %2159 = vmatprep.subr.bf16.mxu0 0
      %2160 = vmatpush1.bf16.msra.mxu0 %v2136
      %2161 = vmatprep.subr.bf16.mxu0 0
      %2162 = vmatpush1.bf16.msra.mxu0 %v2138
      %2163 = vmatprep.subr.bf16.mxu0 0
      %2164 = vmatpush1.bf16.msra.mxu0 %v2140
      %2165 = vmatprep.subr.bf16.mxu0 0
      %2166 = vmatpush1.bf16.msra.mxu0 %v2142
      %2167 = vmatprep.subr.bf16.mxu0 0
      %2168 = vmatpush1.bf16.msra.mxu0 %v2144
      %2169 = vmatprep.subr.bf16.mxu0 0
      %2170 = vmatpush1.bf16.msra.mxu0 %v2146
      %2171 = vmatprep.subr.bf16.mxu0 0
      %2172 = vmatpush1.bf16.msra.mxu0 0
      %2173 = vmatprep.subr.bf16.mxu0 0
      %2174 = vmatpush1.bf16.msra.mxu0 0
      %2175 = vmatprep.subr.bf16.mxu0 0
      %2176 = vmatpush1.bf16.msra.mxu0 0
      %2177 = vmatprep.subr.bf16.mxu0 0
      %2178 = vmatpush1.bf16.msra.mxu0 0
      %2179 = vmatprep.subr.bf16.mxu0 0
      %2180 = vmatpush1.bf16.msra.mxu0 0
      %2181 = vmatprep.subr.bf16.mxu0 0
      %2182 = vmatpush1.bf16.msra.mxu0 0
      %2183 = vmatprep.subr.bf16.mxu0 0
      %2184 = vmatpush1.bf16.msra.mxu0 0
      %2185 = vmatprep.subr.bf16.mxu0 0
      %2186 = vmatpush1.bf16.msra.mxu0 0
      %2187 = vmatprep.mubr.bf16.mxu0 0
      %2188 = vmatmul.mubr.bf16.gmra.mrb[0].mxu0 %v2123
      %v2189 = vpop.f32.mrb[0].mxu0
      %v2190 = vadd.f32 0.0, %v2189
      %v2191 = vpop.f32.mrb[0].mxu0
      %v2192 = vpop.f32.mrb[0].mxu0
      %v2193 = vadd.f32 0.0, %v2192
      %v2194 = vpop.f32.mrb[0].mxu0
      %2195 = vmatprep.mubr.bf16.mxu0 0
      %2196 = vmatmul.mubr.bf16.gmra.mrb[0].mxu0 %v2124
      %v2197 = vpop.f32.mrb[0].mxu0
      %v2198 = vadd.f32 0.0, %v2197
      %v2199 = vpop.f32.mrb[0].mxu0
      %v2200 = vpop.f32.mrb[0].mxu0
      %v2201 = vadd.f32 0.0, %v2200
      %v2202 = vpop.f32.mrb[0].mxu0
      %2203 = vmatprep.mubr.bf16.mxu0 0
      %2204 = vmatmul.mubr.bf16.gmra.mrb[0].mxu0 %v2125
      %v2205 = vpop.f32.mrb[0].mxu0
      %v2206 = vadd.f32 0.0, %v2205
      %v2207 = vpop.f32.mrb[0].mxu0
      %v2208 = vpop.f32.mrb[0].mxu0
      %v2209 = vadd.f32 0.0, %v2208
      %v2210 = vpop.f32.mrb[0].mxu0
      %2211 = vmatprep.mubr.bf16.mxu0 0
      %2212 = vmatmul.mubr.bf16.gmra.mrb[0].mxu0 %v2126
      %v2213 = vpop.f32.mrb[0].mxu0
      %v2214 = vadd.f32 0.0, %v2213
      %v2215 = vpop.f32.mrb[0].mxu0
      %v2216 = vpop.f32.mrb[0].mxu0
      %v2217 = vadd.f32 0.0, %v2216
      %v2218 = vpop.f32.mrb[0].mxu0
      %2219 = vmatprep.mubr.bf16.mxu0 0
      %2220 = vmatmul.mubr.bf16.gmra.mrb[0].mxu0 %v2127
      %v2221 = vpop.f32.mrb[0].mxu0
      %v2222 = vadd.f32 0.0, %v2221
      %v2223 = vpop.f32.mrb[0].mxu0
      %v2224 = vpop.f32.mrb[0].mxu0
      %v2225 = vadd.f32 0.0, %v2224
      %v2226 = vpop.f32.mrb[0].mxu0
      %2227 = vmatprep.mubr.bf16.mxu0 0
      %2228 = vmatmul.mubr.bf16.gmra.mrb[0].mxu0 %v2128
      %v2229 = vpop.f32.mrb[0].mxu0
      %v2230 = vadd.f32 0.0, %v2229
      %v2231 = vpop.f32.mrb[0].mxu0
      %v2232 = vpop.f32.mrb[0].mxu0
      %v2233 = vadd.f32 0.0, %v2232
      %v2234 = vpop.f32.mrb[0].mxu0
      %2235 = vmatprep.mubr.bf16.mxu0 0
      %2236 = vmatmul.mubr.bf16.gmra.mrb[0].mxu0 %v2129
      %v2237 = vpop.f32.mrb[0].mxu0
      %v2238 = vadd.f32 0.0, %v2237
      %v2239 = vpop.f32.mrb[0].mxu0
      %v2240 = vpop.f32.mrb[0].mxu0
      %v2241 = vadd.f32 0.0, %v2240
      %v2242 = vpop.f32.mrb[0].mxu0
      %2243 = vmatprep.mubr.bf16.mxu0 0
      %2244 = vmatmul.mubr.bf16.gmra.mrb[0].mxu0 %v2130
      %v2245 = vpop.f32.mrb[0].mxu0
      %v2246 = vadd.f32 0.0, %v2245
      %v2247 = vpop.f32.mrb[0].mxu0
      %v2248 = vpop.f32.mrb[0].mxu0
      %v2249 = vadd.f32 0.0, %v2248
      %v2250 = vpop.f32.mrb[0].mxu0
      %2251 = vdwg.mxu0
      %v2252 = vpack.c.bf16 %v2193, %v2190
      %v2253 = vpack.c.bf16 %v2201, %v2198
      %v2254 = vpack.c.bf16 %v2209, %v2206
      %v2255 = vpack.c.bf16 %v2217, %v2214
      %v2256 = vpack.c.bf16 %v2225, %v2222
      %v2257 = vpack.c.bf16 %v2233, %v2230
      %v2258 = vpack.c.bf16 %v2241, %v2238
      %v2259 = vpack.c.bf16 %v2249, %v2246
      %2268 = vrot.lane.b32.xlu0 %v1336, 8
      %v2269 = vpop.permute.xlu0 %2268
      %2270 = vrot.lane.b32.xlu0 %v1337, 8
      %v2271 = vpop.permute.xlu0 %2270
      %2272 = vrot.lane.b32.xlu0 %v1338, 8
      %v2273 = vpop.permute.xlu0 %2272
      %2274 = vrot.lane.b32.xlu0 %v1339, 8
      %v2275 = vpop.permute.xlu0 %2274
      %2276 = vrot.lane.b32.xlu0 %v1340, 8
      %v2277 = vpop.permute.xlu0 %2276
      %2278 = vrot.lane.b32.xlu0 %v1341, 8
      %v2279 = vpop.permute.xlu0 %2278
      %2280 = vrot.lane.b32.xlu0 %v1342, 8
      %v2281 = vpop.permute.xlu0 %2280
      %2282 = vrot.lane.b32.xlu0 %v1343, 8
      %v2283 = vpop.permute.xlu0 %2282
      %2292 = vrot.lane.b32.xlu0 %v1794, 16
      %v2293 = vpop.permute.xlu0 %2292
      %2294 = vrot.lane.b32.xlu0 %v1795, 16
      %v2295 = vpop.permute.xlu0 %2294
      %2296 = vrot.lane.b32.xlu0 %v1796, 16
      %v2297 = vpop.permute.xlu0 %2296
      %2298 = vrot.lane.b32.xlu0 %v1797, 16
      %v2299 = vpop.permute.xlu0 %2298
      %2300 = vrot.lane.b32.xlu0 %v1798, 16
      %v2301 = vpop.permute.xlu0 %2300
      %2302 = vrot.lane.b32.xlu0 %v1799, 16
      %v2303 = vpop.permute.xlu0 %2302
      %2304 = vrot.lane.b32.xlu0 %v1800, 16
      %v2305 = vpop.permute.xlu0 %2304
      %2306 = vrot.lane.b32.xlu0 %v1801, 16
      %v2307 = vpop.permute.xlu0 %2306
      %2316 = vrot.lane.b32.xlu0 %v2252, 24
      %v2317 = vpop.permute.xlu0 %2316
      %2318 = vrot.lane.b32.xlu0 %v2253, 24
      %v2319 = vpop.permute.xlu0 %2318
      %2320 = vrot.lane.b32.xlu0 %v2254, 24
      %v2321 = vpop.permute.xlu0 %2320
      %2322 = vrot.lane.b32.xlu0 %v2255, 24
      %v2323 = vpop.permute.xlu0 %2322
      %2324 = vrot.lane.b32.xlu0 %v2256, 24
      %v2325 = vpop.permute.xlu0 %2324
      %2326 = vrot.lane.b32.xlu0 %v2257, 24
      %v2327 = vpop.permute.xlu0 %2326
      %2328 = vrot.lane.b32.xlu0 %v2258, 24
      %v2329 = vpop.permute.xlu0 %2328
      %2330 = vrot.lane.b32.xlu0 %v2259, 24
      %v2331 = vpop.permute.xlu0 %2330
      %v2334 = vsel %vm459, %v878, %v2269
      %v2337 = vsel %vm459, %v879, %v2271
      %v2340 = vsel %vm459, %v880, %v2273
      %v2343 = vsel %vm459, %v881, %v2275
      %v2346 = vsel %vm459, %v882, %v2277
      %v2349 = vsel %vm459, %v883, %v2279
      %v2352 = vsel %vm459, %v884, %v2281
      %v2355 = vsel %vm459, %v885, %v2283
      %vm2356 = vcmask 130048
      %v2358 = vsel %vm2356, %v2334, %v2293
      %v2360 = vsel %vm2356, %v2337, %v2295
      %v2362 = vsel %vm2356, %v2340, %v2297
      %v2364 = vsel %vm2356, %v2343, %v2299
      %v2366 = vsel %vm2356, %v2346, %v2301
      %v2368 = vsel %vm2356, %v2349, %v2303
      %v2370 = vsel %vm2356, %v2352, %v2305
      %v2372 = vsel %vm2356, %v2355, %v2307
      %vm2373 = vcmask 195584
      %v2375 = vsel %vm2373, %v2358, %v2317
      %v2377 = vsel %vm2373, %v2360, %v2319
      %v2379 = vsel %vm2373, %v2362, %v2321
      %v2381 = vsel %vm2373, %v2364, %v2323
      %v2383 = vsel %vm2373, %v2366, %v2325
      %v2385 = vsel %vm2373, %v2368, %v2327
      %v2387 = vsel %vm2373, %v2370, %v2329
      %v2389 = vsel %vm2373, %v2372, %v2331
      %v2390 = vld [vmem:[%s2] sm:$0xf]
      %v2391 = vld [vmem:[%s2 + $0x4] sm:$0xf]
      %v2392 = vld [vmem:[%s2 + $0x8] sm:$0xf]
      %v2393 = vld [vmem:[%s2 + $0xc] sm:$0xf]
      %v2394 = vld [vmem:[%s3] sm:$0x1]
      %v2396 = vlaneseq
      %v2397 = vshrl.u32 %v2396, 7
      %v2398 = vsub.s32 0, %v2397
      %v2399 = vrot.slane %v2394, %v2398
      %v2405 = vunpack.c.l.b16 %v2390
      %v2406 = vunpack.c.l.b16 %v2391
      %v2407 = vunpack.c.l.b16 %v2392
      %v2408 = vunpack.c.l.b16 %v2393
      %v2409 = vpack.c.b16 %v2406, %v2405
      %v2410 = vpack.c.b16 %v2408, %v2407
      %v2413 = vsel %vm298, %v2375, 0
      %v2415 = vsel %vm298, %v2377, 0
      %v2417 = vsel %vm298, %v2379, 0
      %v2419 = vsel %vm298, %v2381, 0
      %v2421 = vsel %vm298, %v2383, 0
      %v2423 = vsel %vm298, %v2385, 0
      %v2425 = vsel %vm298, %v2387, 0
      %v2427 = vsel %vm298, %v2389, 0
      %2429 = vmatprep.subr.bf16.mxu0 0
      %2430 = vmatpush1.bf16.msra.mxu0 %v2409
      %2431 = vmatprep.subr.bf16.mxu0 0
      %2432 = vmatpush1.bf16.msra.mxu0 %v2410
      %2433 = vmatprep.subr.bf16.mxu0 0
      %2434 = vmatpush1.bf16.msra.mxu0 0
      %2435 = vmatprep.subr.bf16.mxu0 0
      %2436 = vmatpush1.bf16.msra.mxu0 0
      %2437 = vmatprep.subr.bf16.mxu0 0
      %2438 = vmatpush1.bf16.msra.mxu0 0
      %2439 = vmatprep.subr.bf16.mxu0 0
      %2440 = vmatpush1.bf16.msra.mxu0 0
      %2441 = vmatprep.subr.bf16.mxu0 0
      %2442 = vmatpush1.bf16.msra.mxu0 0
      %2443 = vmatprep.subr.bf16.mxu0 0
      %2444 = vmatpush1.bf16.msra.mxu0 0
      %2445 = vmatprep.subr.bf16.mxu0 0
      %2446 = vmatpush1.bf16.msra.mxu0 0
      %2447 = vmatprep.subr.bf16.mxu0 0
      %2448 = vmatpush1.bf16.msra.mxu0 0
      %2449 = vmatprep.subr.bf16.mxu0 0
      %2450 = vmatpush1.bf16.msra.mxu0 0
      %2451 = vmatprep.subr.bf16.mxu0 0
      %2452 = vmatpush1.bf16.msra.mxu0 0
      %2453 = vmatprep.subr.bf16.mxu0 0
      %2454 = vmatpush1.bf16.msra.mxu0 0
      %2455 = vmatprep.subr.bf16.mxu0 0
      %2456 = vmatpush1.bf16.msra.mxu0 0
      %2457 = vmatprep.subr.bf16.mxu0 0
      %2458 = vmatpush1.bf16.msra.mxu0 0
      %2459 = vmatprep.subr.bf16.mxu0 0
      %2460 = vmatpush1.bf16.msra.mxu0 0
      %2461 = vmatprep.mubr.bf16.mxu0 0
      %2462 = vmatmul.mubr.bf16.gmra.mrb[0].mxu0 %v2413
      %v2463 = vpop.f32.mrb[0].mxu0
      %v2464 = vadd.f32 %v2399, %v2463
      %v2465 = vpop.f32.mrb[0].mxu0
      %v2466 = vpop.f32.mrb[0].mxu0
      %v2467 = vadd.f32 %v2399, %v2466
      %v2468 = vpop.f32.mrb[0].mxu0
      %2469 = vmatprep.mubr.bf16.mxu0 0
      %2470 = vmatmul.mubr.bf16.gmra.mrb[0].mxu0 %v2415
      %v2471 = vpop.f32.mrb[0].mxu0
      %v2472 = vadd.f32 %v2399, %v2471
      %v2473 = vpop.f32.mrb[0].mxu0
      %v2474 = vpop.f32.mrb[0].mxu0
      %v2475 = vadd.f32 %v2399, %v2474
      %v2476 = vpop.f32.mrb[0].mxu0
      %2477 = vmatprep.mubr.bf16.mxu0 0
      %2478 = vmatmul.mubr.bf16.gmra.mrb[0].mxu0 %v2417
      %v2479 = vpop.f32.mrb[0].mxu0
      %v2480 = vadd.f32 %v2399, %v2479
      %v2481 = vpop.f32.mrb[0].mxu0
      %v2482 = vpop.f32.mrb[0].mxu0
      %v2483 = vadd.f32 %v2399, %v2482
      %v2484 = vpop.f32.mrb[0].mxu0
      %2485 = vmatprep.mubr.bf16.mxu0 0
      %2486 = vmatmul.mubr.bf16.gmra.mrb[0].mxu0 %v2419
      %v2487 = vpop.f32.mrb[0].mxu0
      %v2488 = vadd.f32 %v2399, %v2487
      %v2489 = vpop.f32.mrb[0].mxu0
      %v2490 = vpop.f32.mrb[0].mxu0
      %v2491 = vadd.f32 %v2399, %v2490
      %v2492 = vpop.f32.mrb[0].mxu0
      %2493 = vmatprep.mubr.bf16.mxu0 0
      %2494 = vmatmul.mubr.bf16.gmra.mrb[0].mxu0 %v2421
      %v2495 = vpop.f32.mrb[0].mxu0
      %v2496 = vadd.f32 %v2399, %v2495
      %v2497 = vpop.f32.mrb[0].mxu0
      %v2498 = vpop.f32.mrb[0].mxu0
      %v2499 = vadd.f32 %v2399, %v2498
      %v2500 = vpop.f32.mrb[0].mxu0
      %2501 = vmatprep.mubr.bf16.mxu0 0
      %2502 = vmatmul.mubr.bf16.gmra.mrb[0].mxu0 %v2423
      %v2503 = vpop.f32.mrb[0].mxu0
      %v2504 = vadd.f32 %v2399, %v2503
      %v2505 = vpop.f32.mrb[0].mxu0
      %v2506 = vpop.f32.mrb[0].mxu0
      %v2507 = vadd.f32 %v2399, %v2506
      %v2508 = vpop.f32.mrb[0].mxu0
      %2509 = vmatprep.mubr.bf16.mxu0 0
      %2510 = vmatmul.mubr.bf16.gmra.mrb[0].mxu0 %v2425
      %v2511 = vpop.f32.mrb[0].mxu0
      %v2512 = vadd.f32 %v2399, %v2511
      %v2513 = vpop.f32.mrb[0].mxu0
      %v2514 = vpop.f32.mrb[0].mxu0
      %v2515 = vadd.f32 %v2399, %v2514
      %v2516 = vpop.f32.mrb[0].mxu0
      %2517 = vmatprep.mubr.bf16.mxu0 0
      %2518 = vmatmul.mubr.bf16.gmra.mrb[0].mxu0 %v2427
      %v2519 = vpop.f32.mrb[0].mxu0
      %v2520 = vadd.f32 %v2399, %v2519
      %v2521 = vpop.f32.mrb[0].mxu0
      %v2522 = vpop.f32.mrb[0].mxu0
      %v2523 = vadd.f32 %v2399, %v2522
      %v2524 = vpop.f32.mrb[0].mxu0
      %2525 = vdwg.mxu0
      %2526 = vst.msk [vmem:[%s224] sm:$0xff] %vm298, %v2464
      %2527 = vst.msk [vmem:[%s224 + $0x8] sm:$0xff] %vm298, %v2467
      %2528 = vst.msk [vmem:[%s224 + $0x10] sm:$0xff] %vm298, %v2472
      %2529 = vst.msk [vmem:[%s224 + $0x18] sm:$0xff] %vm298, %v2475
      %2530 = vst.msk [vmem:[%s224 + $0x20] sm:$0xff] %vm298, %v2480
      %2531 = vst.msk [vmem:[%s224 + $0x28] sm:$0xff] %vm298, %v2483
      %2532 = vst.msk [vmem:[%s224 + $0x30] sm:$0xff] %vm298, %v2488
      %2533 = vst.msk [vmem:[%s224 + $0x38] sm:$0xff] %vm298, %v2491
      %2534 = vst.msk [vmem:[%s224 + $0x40] sm:$0xff] %vm298, %v2496
      %2535 = vst.msk [vmem:[%s224 + $0x48] sm:$0xff] %vm298, %v2499
      %2536 = vst.msk [vmem:[%s224 + $0x50] sm:$0xff] %vm298, %v2504
      %2537 = vst.msk [vmem:[%s224 + $0x58] sm:$0xff] %vm298, %v2507
      %2538 = vst.msk [vmem:[%s224 + $0x60] sm:$0xff] %vm298, %v2512
      %2539 = vst.msk [vmem:[%s224 + $0x68] sm:$0xff] %vm298, %v2515
      %2540 = vst.msk [vmem:[%s224 + $0x70] sm:$0xff] %vm298, %v2520
      %2541 = vst.msk [vmem:[%s224 + $0x78] sm:$0xff] %vm298, %v2523
      %p2542 = scmp.lt.s32.totalorder %s16, 1
      %s2543 = scalar_select %p2542, %s16, 1
      %s2544 = smul.addr %s2543, 16
      %s2545 = smul.addr %s2544, 8
      %s2546 = scalar_lea.vmem %s5, %s2545
      // Predicated region
      $region41: #{tpu_custom_call.1} parent=39 // pred_check
        %p2547 = pneg %p144
      $region42: #{tpu_custom_call.1} parent=39 // pred_check_branch
        %2549 = sbr.rel (%p2547) target = $region44
      $region43: #{tpu_custom_call.1} parent=39 // pred_region
        _
      $region44: #{tpu_custom_call.1} parent=39 // pred_fallthru
        _
    $region40: #{tpu_custom_call.1} parent=5 // pred_fallthru
      _
    %p2550 = scmp.le.s32.totalorder 2, %s11
    // Predicated region
    $region45: #{tpu_custom_call.1} parent=5 // pred_check
      %p2551 = pneg %p2550
    $region46: #{tpu_custom_call.1} parent=5 // pred_check_branch
      %2553 = sbr.rel (%p2551) target = $region48
    $region47: #{tpu_custom_call.1} parent=5 // pred_region
      %s2554 = ssub.s32 %s11, 2
      // Predicated region
      $region49: #{tpu_custom_call.1} parent=47 // pred_check
        %p2555 = pneg %p150
      $region50: #{tpu_custom_call.1} parent=47 // pred_check_branch
        %2557 = sbr.rel (%p2555) target = $region52
      $region51: #{tpu_custom_call.1} parent=47 // pred_region
        %p2558 = scmp.lt.s32.totalorder %s17, 1
        %s2559 = scalar_select %p2558, %s17, 1
        %s2560 = smul.addr %s2559, 16
        %s2561 = smul.addr %s2560, 8
        %s2562 = scalar_lea.vmem %s5, %s2561
      $region52: #{tpu_custom_call.1} parent=47 // pred_fallthru
        _
    $region48: #{tpu_custom_call.1} parent=5 // pred_fallthru
      _
  $region6: #{tpu_custom_call.1} parent=0 // loop_footer
    %s15 = sadd.s32 1, %s11
  $region7: #{tpu_custom_call.1} parent=0 // loop_footer_branch
    %10 = sbr.rel target = $region3
  $region8: #{tpu_custom_call.1} parent=0 // loop_exit
    _

</llo_original>
